<compile_context>
chip_gen: v7x
topology: tpu7x:2x2x1
jax: 0.10.0
libtpu: 0.0.40
codegen_flags: <defaults>
</compile_context>

<pallas_src>
import functools

import jax
import jax.numpy as jnp
import numpy as np
from jax.experimental import pallas as pl
from jax.experimental.pallas import tpu as pltpu

INPUT = 700
HIDDEN = 128
OUT = 20
GATES = 4 * HIDDEN


def _lstm_recurrent_kernel(gx_ref, whh_ref, h_out_ref, h_sc, c_sc, *, t_blk):
    """t_blk LSTM steps per grid iteration; h/c persist in VMEM scratch.

    gx_ref:    (t_blk, B, 4H) bf16  precomputed x @ W_ih^T + (b_ih + b_hh),
                                    gate order permuted to [i, f, o, g]
    whh_ref:   (H, 4H)        bf16  recurrent weights, pre-transposed, resident
    h_out_ref: (t_blk, B, H)  f32   hidden-state sequence (lane-dense, 128)
    """
    tb = pl.program_id(0)

    @pl.when(tb == 0)
    def _():
        h_sc[...] = jnp.zeros_like(h_sc)
        c_sc[...] = jnp.zeros_like(c_sc)

    h = h_sc[...]                 # (B, H) f32
    c = c_sc[...]                 # (B, H) f32

    # Statically unrolled inner loop: all ref indices are static and the
    # scheduler sees the whole step chain.  whh_ref is deliberately re-read
    # inside the dot every step (streamed from VMEM, no 64-vreg live value).
    for s in range(t_blk):
        rec = jnp.dot(h.astype(jnp.bfloat16), whh_ref[...],
                      preferred_element_type=jnp.float32)      # (B, 4H) f32
        gates = gx_ref[s].astype(jnp.float32) + rec
        sig = jax.nn.sigmoid(gates[:, :3 * HIDDEN])             # one EUP pass
        i_g = sig[:, 0 * HIDDEN:1 * HIDDEN]
        f_g = sig[:, 1 * HIDDEN:2 * HIDDEN]
        o_g = sig[:, 2 * HIDDEN:3 * HIDDEN]
        g_g = jnp.tanh(gates[:, 3 * HIDDEN:4 * HIDDEN])
        c = f_g * c + i_g * g_g
        h = o_g * jnp.tanh(c)
        h_out_ref[s] = h

    h_sc[...] = h
    c_sc[...] = c


@jax.jit
def p_ann_lstm_forward(x_input, w_ih, w_hh, b_ih, b_hh, w_fc, b_fc):
    """x_input: (B, T, INPUT) float32 -> (T, B, OUT) float32."""
    B, T, _ = x_input.shape

    # Larger time block amortizes per-grid-step pipeline overhead.
    t_blk = T if T <= 128 else 128
    T_pad = pl.cdiv(T, t_blk) * t_blk
    B_pad = pl.cdiv(B, 8) * 8      # f32 sublane count

    # Fold the gate-column permutation [i, f, o | g] into the weights once.
    perm = np.concatenate([
        np.arange(0 * HIDDEN, 1 * HIDDEN),   # i
        np.arange(1 * HIDDEN, 2 * HIDDEN),   # f
        np.arange(3 * HIDDEN, 4 * HIDDEN),   # o
        np.arange(2 * HIDDEN, 3 * HIDDEN),   # g
    ])
    w_ih_p = w_ih[perm]                                        # (4H, IN)
    w_hh_p = w_hh[perm]                                        # (4H, H)
    bias_p = (b_ih + b_hh)[perm].astype(jnp.float32)           # (4H,)

    # --- glue (plain XLA, done once) -------------------------------------
    # Pad time/batch on x BEFORE the projection: no second pad pass over gx.
    x_tm = jnp.transpose(x_input, (1, 0, 2)).astype(jnp.float32)   # (T, B, 700)
    x_pad = jnp.pad(x_tm, ((0, T_pad - T), (0, B_pad - B), (0, 0)))

    # Hoisted non-recurrent input projection: one bf16 matmul, f32 accumulate,
    # bias folded in, stored bf16 (it is the only large HBM stream).
    gx = jnp.dot(x_pad.reshape(T_pad * B_pad, INPUT).astype(jnp.bfloat16),
                 w_ih_p.T.astype(jnp.bfloat16),
                 preferred_element_type=jnp.float32)
    gates_x = (gx + bias_p).astype(jnp.bfloat16).reshape(T_pad, B_pad, GATES)

    whh_t = jnp.transpose(w_hh_p).astype(jnp.bfloat16)             # (H, 4H)

    grid_spec = pltpu.PrefetchScalarGridSpec(
        num_scalar_prefetch=0,
        grid=(T_pad // t_blk,),
        in_specs=[
            pl.BlockSpec((t_blk, B_pad, GATES), lambda t: (t, 0, 0)),  # gates_x
            # W_hh^T: constant across the grid -> resident in VMEM, untiled,
            # no pointless double buffer.
            pl.BlockSpec(memory_space=pltpu.MemorySpace.VMEM),
        ],
        out_specs=pl.BlockSpec((t_blk, B_pad, HIDDEN), lambda t: (t, 0, 0)),
        scratch_shapes=[
            pltpu.VMEM((B_pad, HIDDEN), jnp.float32),  # h
            pltpu.VMEM((B_pad, HIDDEN), jnp.float32),  # c
        ],
    )

    hs_pad = pl.pallas_call(
        functools.partial(_lstm_recurrent_kernel, t_blk=t_blk),
        out_shape=jax.ShapeDtypeStruct((T_pad, B_pad, HIDDEN), jnp.float32),
        grid_spec=grid_spec,
        compiler_params=pltpu.CompilerParams(
            dimension_semantics=("arbitrary",)),   # recurrence: sequential grid
    )(gates_x, whh_t)

    hs = hs_pad[:T, :B]                                             # (T, B, H)

    # Final projection applied once to the full sequence (the 20-wide output
    # never appears inside the recurrent loop).
    y = (hs.reshape(T * B, HIDDEN) @ w_fc.T.astype(jnp.float32)
         + b_fc.astype(jnp.float32)).reshape(T, B, OUT)
    return y


def _reference_forward(x_input, w_ih, w_hh, b_ih, b_hh, w_fc, b_fc):
    """Pure-JAX f32 reference with identical semantics (lax.scan LSTM)."""
    x_tm = jnp.transpose(x_input, (1, 0, 2))
    B = x_tm.shape[1]

    def step(carry, x_t):
        h, c = carry
        gates = x_t @ w_ih.T + b_ih + h @ w_hh.T + b_hh
        i = jax.nn.sigmoid(gates[:, 0 * HIDDEN:1 * HIDDEN])
        f = jax.nn.sigmoid(gates[:, 1 * HIDDEN:2 * HIDDEN])
        g = jnp.tanh(gates[:, 2 * HIDDEN:3 * HIDDEN])
        o = jax.nn.sigmoid(gates[:, 3 * HIDDEN:4 * HIDDEN])
        c = f * c + i * g
        h = o * jnp.tanh(c)
        return (h, c), h

    h0 = jnp.zeros((B, HIDDEN), jnp.float32)
    c0 = jnp.zeros((B, HIDDEN), jnp.float32)
    _, hs = jax.lax.scan(step, (h0, c0), x_tm)
    return hs @ w_fc.T + b_fc


if __name__ == "__main__":
    key = jax.random.PRNGKey(0)
    kx, k1, k2, k3, k4, k5, k6 = jax.random.split(key, 7)

    B, T = 2, 8
    x = jax.random.normal(kx, (B, T, INPUT), jnp.float32)

    # Deterministic parameter init (PyTorch-style uniform(-1/sqrt(H), 1/sqrt(H))).
    s = 1.0 / np.sqrt(HIDDEN)
    w_ih = jax.random.uniform(k1, (4 * HIDDEN, INPUT), jnp.float32, -s, s)
    w_hh = jax.random.uniform(k2, (4 * HIDDEN, HIDDEN), jnp.float32, -s, s)
    b_ih = jax.random.uniform(k3, (4 * HIDDEN,), jnp.float32, -s, s)
    b_hh = jax.random.uniform(k4, (4 * HIDDEN,), jnp.float32, -s, s)
    w_fc = jax.random.uniform(k5, (OUT, HIDDEN), jnp.float32, -s, s)
    b_fc = jax.random.uniform(k6, (OUT,), jnp.float32, -s, s)

    y = p_ann_lstm_forward(x, w_ih, w_hh, b_ih, b_hh, w_fc, b_fc)
    y = jax.block_until_ready(y)

    y_ref = _reference_forward(x, w_ih, w_hh, b_ih, b_hh, w_fc, b_fc)
    # bf16 matmul operands (f32 accumulation) loosen the match vs. the pure-f32
    # reference slightly.
    np.testing.assert_allclose(np.asarray(y), np.asarray(y_ref),
                               rtol=3e-2, atol=3e-2)

    assert y.shape == (T, B, OUT)
    print("KERNEL_OK")
</pallas_src>

<mosaic_0001>
module attributes {stable_mosaic.version = 11 : i64} {
  func.func @_lstm_recurrent_kernel(%arg0: i32, %arg1: memref<8x8x512xbf16, #tpu.memory_space<vmem>>, %arg2: memref<128x512xbf16, #tpu.memory_space<vmem>>, %arg3: memref<8x8x128xf32, #tpu.memory_space<vmem>>, %arg4: memref<8x128xf32, #tpu.memory_space<vmem>>, %arg5: memref<8x128xf32, #tpu.memory_space<vmem>>) attributes {dimension_semantics = [#tpu.dimension_semantics<arbitrary>], iteration_bounds = array<i64: 1>, scalar_prefetch = 0 : i64, scratch_operands = 2 : i64, tpu.core_type = #tpu.core_type<tc>, window_params = [{transform_indices = @transform_0, window_bounds = array<i64: 8, 8, 512>}, {pipeline_mode = #tpu.pipeline_mode<synchronous>, transform_indices = @transform_1, window_bounds = array<i64: 128, 512>}, {transform_indices = @transform_2, window_bounds = array<i64: 8, 8, 128>}]} {
    %c0_i32 = arith.constant 0 : i32
    %0 = arith.cmpi eq, %arg0, %c0_i32 : i32
    %1 = arith.extui %0 : i1 to i32
    %c0_i32_0 = arith.constant 0 : i32
    %2 = arith.cmpi ne, %1, %c0_i32_0 : i32
    scf.if %2 {
      %cst_80 = arith.constant 0.000000e+00 : f32
      %215 = vector.broadcast %cst_80 : f32 to vector<8x128xf32>
      %c0_81 = arith.constant 0 : index
      %c0_82 = arith.constant 0 : index
      %216 = vector.load %arg4[%c0_81, %c0_82] : memref<8x128xf32, #tpu.memory_space<vmem>>, vector<8x128xf32>
      tpu.vector_store %arg4[%c0_81, %c0_82], %215 {strides = array<i32>} : memref<8x128xf32, #tpu.memory_space<vmem>>, vector<8x128xf32>,
      %cst_83 = arith.constant 0.000000e+00 : f32
      %217 = vector.broadcast %cst_83 : f32 to vector<8x128xf32>
      %c0_84 = arith.constant 0 : index
      %c0_85 = arith.constant 0 : index
      %218 = vector.load %arg5[%c0_84, %c0_85] : memref<8x128xf32, #tpu.memory_space<vmem>>, vector<8x128xf32>
      tpu.vector_store %arg5[%c0_84, %c0_85], %217 {strides = array<i32>} : memref<8x128xf32, #tpu.memory_space<vmem>>, vector<8x128xf32>,
    } else {
    }
    %c0 = arith.constant 0 : index
    %c0_1 = arith.constant 0 : index
    %3 = vector.load %arg4[%c0, %c0_1] : memref<8x128xf32, #tpu.memory_space<vmem>>, vector<8x128xf32>
    %c0_2 = arith.constant 0 : index
    %c0_3 = arith.constant 0 : index
    %4 = vector.load %arg5[%c0_2, %c0_3] : memref<8x128xf32, #tpu.memory_space<vmem>>, vector<8x128xf32>
    %5 = arith.truncf %3 : vector<8x128xf32> to vector<8x128xbf16>
    %c0_4 = arith.constant 0 : index
    %c0_5 = arith.constant 0 : index
    %6 = vector.load %arg2[%c0_4, %c0_5] : memref<128x512xbf16, #tpu.memory_space<vmem>>, vector<128x512xbf16>
    %cst = arith.constant dense<0.000000e+00> : vector<8x512xf32>
    %7 = tpu.matmul %5, %6, %cst {dimension_numbers = #tpu.dot_dimension_numbers<[1], [0], [0], [1], [0, 0, 1, 1], [], []>} : vector<8x128xbf16>, vector<128x512xbf16>, vector<8x512xf32> -> vector<8x512xf32>
    %c0_6 = arith.constant 0 : index
    %c0_7 = arith.constant 0 : index
    %c0_8 = arith.constant 0 : index
    %8 = vector.load %arg1[%c0_6, %c0_7, %c0_8] : memref<8x8x512xbf16, #tpu.memory_space<vmem>>, vector<1x8x512xbf16>
    %9 = vector.shape_cast %8 : vector<1x8x512xbf16> to vector<8x512xbf16>
    %10 = arith.extf %9 : vector<8x512xbf16> to vector<8x512xf32>
    %11 = arith.addf %10, %7 : vector<8x512xf32>
    %12 = vector.extract_strided_slice %11 {offsets = [0, 0], sizes = [8, 384], strides = [1, 1]} : vector<8x512xf32> to vector<8x384xf32>
    %13 = arith.negf %12 : vector<8x384xf32>
    %14 = math.exp %13 : vector<8x384xf32>
    %cst_9 = arith.constant 1.000000e+00 : f32
    %15 = vector.broadcast %cst_9 : f32 to vector<8x384xf32>
    %16 = arith.addf %15, %14 : vector<8x384xf32>
    %17 = arith.divf %15, %16 : vector<8x384xf32>
    %18 = vector.extract_strided_slice %17 {offsets = [0, 0], sizes = [8, 128], strides = [1, 1]} : vector<8x384xf32> to vector<8x128xf32>
    %19 = vector.extract_strided_slice %17 {offsets = [0, 128], sizes = [8, 128], strides = [1, 1]} : vector<8x384xf32> to vector<8x128xf32>
    %20 = vector.extract_strided_slice %17 {offsets = [0, 256], sizes = [8, 128], strides = [1, 1]} : vector<8x384xf32> to vector<8x128xf32>
    %21 = vector.extract_strided_slice %11 {offsets = [0, 384], sizes = [8, 128], strides = [1, 1]} : vector<8x512xf32> to vector<8x128xf32>
    %22 = math.tanh %21 : vector<8x128xf32>
    %23 = arith.mulf %19, %4 : vector<8x128xf32>
    %24 = arith.mulf %18, %22 : vector<8x128xf32>
    %25 = arith.addf %23, %24 : vector<8x128xf32>
    %26 = math.tanh %25 : vector<8x128xf32>
    %27 = arith.mulf %20, %26 : vector<8x128xf32>
    %c0_10 = arith.constant 0 : index
    %c0_11 = arith.constant 0 : index
    %c0_12 = arith.constant 0 : index
    %28 = vector.load %arg3[%c0_10, %c0_11, %c0_12] : memref<8x8x128xf32, #tpu.memory_space<vmem>>, vector<1x8x128xf32>
    %29 = vector.shape_cast %28 : vector<1x8x128xf32> to vector<8x128xf32>
    %30 = vector.shape_cast %27 : vector<8x128xf32> to vector<1x8x128xf32>
    tpu.vector_store %arg3[%c0_10, %c0_11, %c0_12], %30 {strides = array<i32>} : memref<8x8x128xf32, #tpu.memory_space<vmem>>, vector<1x8x128xf32>,
    %31 = arith.truncf %27 : vector<8x128xf32> to vector<8x128xbf16>
    %c0_13 = arith.constant 0 : index
    %c0_14 = arith.constant 0 : index
    %32 = vector.load %arg2[%c0_13, %c0_14] : memref<128x512xbf16, #tpu.memory_space<vmem>>, vector<128x512xbf16>
    %cst_15 = arith.constant dense<0.000000e+00> : vector<8x512xf32>
    %33 = tpu.matmul %31, %32, %cst_15 {dimension_numbers = #tpu.dot_dimension_numbers<[1], [0], [0], [1], [0, 0, 1, 1], [], []>} : vector<8x128xbf16>, vector<128x512xbf16>, vector<8x512xf32> -> vector<8x512xf32>
    %c1 = arith.constant 1 : index
    %c0_16 = arith.constant 0 : index
    %c0_17 = arith.constant 0 : index
    %34 = vector.load %arg1[%c1, %c0_16, %c0_17] : memref<8x8x512xbf16, #tpu.memory_space<vmem>>, vector<1x8x512xbf16>
    %35 = vector.shape_cast %34 : vector<1x8x512xbf16> to vector<8x512xbf16>
    %36 = arith.extf %35 : vector<8x512xbf16> to vector<8x512xf32>
    %37 = arith.addf %36, %33 : vector<8x512xf32>
    %38 = vector.extract_strided_slice %37 {offsets = [0, 0], sizes = [8, 384], strides = [1, 1]} : vector<8x512xf32> to vector<8x384xf32>
    %39 = arith.negf %38 : vector<8x384xf32>
    %40 = math.exp %39 : vector<8x384xf32>
    %cst_18 = arith.constant 1.000000e+00 : f32
    %41 = vector.broadcast %cst_18 : f32 to vector<8x384xf32>
    %42 = arith.addf %41, %40 : vector<8x384xf32>
    %43 = arith.divf %41, %42 : vector<8x384xf32>
    %44 = vector.extract_strided_slice %43 {offsets = [0, 0], sizes = [8, 128], strides = [1, 1]} : vector<8x384xf32> to vector<8x128xf32>
    %45 = vector.extract_strided_slice %43 {offsets = [0, 128], sizes = [8, 128], strides = [1, 1]} : vector<8x384xf32> to vector<8x128xf32>
    %46 = vector.extract_strided_slice %43 {offsets = [0, 256], sizes = [8, 128], strides = [1, 1]} : vector<8x384xf32> to vector<8x128xf32>
    %47 = vector.extract_strided_slice %37 {offsets = [0, 384], sizes = [8, 128], strides = [1, 1]} : vector<8x512xf32> to vector<8x128xf32>
    %48 = math.tanh %47 : vector<8x128xf32>
    %49 = arith.mulf %45, %25 : vector<8x128xf32>
    %50 = arith.mulf %44, %48 : vector<8x128xf32>
    %51 = arith.addf %49, %50 : vector<8x128xf32>
    %52 = math.tanh %51 : vector<8x128xf32>
    %53 = arith.mulf %46, %52 : vector<8x128xf32>
    %c1_19 = arith.constant 1 : index
    %c0_20 = arith.constant 0 : index
    %c0_21 = arith.constant 0 : index
    %54 = vector.load %arg3[%c1_19, %c0_20, %c0_21] : memref<8x8x128xf32, #tpu.memory_space<vmem>>, vector<1x8x128xf32>
    %55 = vector.shape_cast %54 : vector<1x8x128xf32> to vector<8x128xf32>
    %56 = vector.shape_cast %53 : vector<8x128xf32> to vector<1x8x128xf32>
    tpu.vector_store %arg3[%c1_19, %c0_20, %c0_21], %56 {strides = array<i32>} : memref<8x8x128xf32, #tpu.memory_space<vmem>>, vector<1x8x128xf32>,
    %57 = arith.truncf %53 : vector<8x128xf32> to vector<8x128xbf16>
    %c0_22 = arith.constant 0 : index
    %c0_23 = arith.constant 0 : index
    %58 = vector.load %arg2[%c0_22, %c0_23] : memref<128x512xbf16, #tpu.memory_space<vmem>>, vector<128x512xbf16>
    %cst_24 = arith.constant dense<0.000000e+00> : vector<8x512xf32>
    %59 = tpu.matmul %57, %58, %cst_24 {dimension_numbers = #tpu.dot_dimension_numbers<[1], [0], [0], [1], [0, 0, 1, 1], [], []>} : vector<8x128xbf16>, vector<128x512xbf16>, vector<8x512xf32> -> vector<8x512xf32>
    %c2 = arith.constant 2 : index
    %c0_25 = arith.constant 0 : index
    %c0_26 = arith.constant 0 : index
    %60 = vector.load %arg1[%c2, %c0_25, %c0_26] : memref<8x8x512xbf16, #tpu.memory_space<vmem>>, vector<1x8x512xbf16>
    %61 = vector.shape_cast %60 : vector<1x8x512xbf16> to vector<8x512xbf16>
    %62 = arith.extf %61 : vector<8x512xbf16> to vector<8x512xf32>
    %63 = arith.addf %62, %59 : vector<8x512xf32>
    %64 = vector.extract_strided_slice %63 {offsets = [0, 0], sizes = [8, 384], strides = [1, 1]} : vector<8x512xf32> to vector<8x384xf32>
    %65 = arith.negf %64 : vector<8x384xf32>
    %66 = math.exp %65 : vector<8x384xf32>
    %cst_27 = arith.constant 1.000000e+00 : f32
    %67 = vector.broadcast %cst_27 : f32 to vector<8x384xf32>
    %68 = arith.addf %67, %66 : vector<8x384xf32>
    %69 = arith.divf %67, %68 : vector<8x384xf32>
    %70 = vector.extract_strided_slice %69 {offsets = [0, 0], sizes = [8, 128], strides = [1, 1]} : vector<8x384xf32> to vector<8x128xf32>
    %71 = vector.extract_strided_slice %69 {offsets = [0, 128], sizes = [8, 128], strides = [1, 1]} : vector<8x384xf32> to vector<8x128xf32>
    %72 = vector.extract_strided_slice %69 {offsets = [0, 256], sizes = [8, 128], strides = [1, 1]} : vector<8x384xf32> to vector<8x128xf32>
    %73 = vector.extract_strided_slice %63 {offsets = [0, 384], sizes = [8, 128], strides = [1, 1]} : vector<8x512xf32> to vector<8x128xf32>
    %74 = math.tanh %73 : vector<8x128xf32>
    %75 = arith.mulf %71, %51 : vector<8x128xf32>
    %76 = arith.mulf %70, %74 : vector<8x128xf32>
    %77 = arith.addf %75, %76 : vector<8x128xf32>
    %78 = math.tanh %77 : vector<8x128xf32>
    %79 = arith.mulf %72, %78 : vector<8x128xf32>
    %c2_28 = arith.constant 2 : index
    %c0_29 = arith.constant 0 : index
    %c0_30 = arith.constant 0 : index
    %80 = vector.load %arg3[%c2_28, %c0_29, %c0_30] : memref<8x8x128xf32, #tpu.memory_space<vmem>>, vector<1x8x128xf32>
    %81 = vector.shape_cast %80 : vector<1x8x128xf32> to vector<8x128xf32>
    %82 = vector.shape_cast %79 : vector<8x128xf32> to vector<1x8x128xf32>
    tpu.vector_store %arg3[%c2_28, %c0_29, %c0_30], %82 {strides = array<i32>} : memref<8x8x128xf32, #tpu.memory_space<vmem>>, vector<1x8x128xf32>,
    %83 = arith.truncf %79 : vector<8x128xf32> to vector<8x128xbf16>
    %c0_31 = arith.constant 0 : index
    %c0_32 = arith.constant 0 : index
    %84 = vector.load %arg2[%c0_31, %c0_32] : memref<128x512xbf16, #tpu.memory_space<vmem>>, vector<128x512xbf16>
    %cst_33 = arith.constant dense<0.000000e+00> : vector<8x512xf32>
    %85 = tpu.matmul %83, %84, %cst_33 {dimension_numbers = #tpu.dot_dimension_numbers<[1], [0], [0], [1], [0, 0, 1, 1], [], []>} : vector<8x128xbf16>, vector<128x512xbf16>, vector<8x512xf32> -> vector<8x512xf32>
    %c3 = arith.constant 3 : index
    %c0_34 = arith.constant 0 : index
    %c0_35 = arith.constant 0 : index
    %86 = vector.load %arg1[%c3, %c0_34, %c0_35] : memref<8x8x512xbf16, #tpu.memory_space<vmem>>, vector<1x8x512xbf16>
    %87 = vector.shape_cast %86 : vector<1x8x512xbf16> to vector<8x512xbf16>
    %88 = arith.extf %87 : vector<8x512xbf16> to vector<8x512xf32>
    %89 = arith.addf %88, %85 : vector<8x512xf32>
    %90 = vector.extract_strided_slice %89 {offsets = [0, 0], sizes = [8, 384], strides = [1, 1]} : vector<8x512xf32> to vector<8x384xf32>
    %91 = arith.negf %90 : vector<8x384xf32>
    %92 = math.exp %91 : vector<8x384xf32>
    %cst_36 = arith.constant 1.000000e+00 : f32
    %93 = vector.broadcast %cst_36 : f32 to vector<8x384xf32>
    %94 = arith.addf %93, %92 : vector<8x384xf32>
    %95 = arith.divf %93, %94 : vector<8x384xf32>
    %96 = vector.extract_strided_slice %95 {offsets = [0, 0], sizes = [8, 128], strides = [1, 1]} : vector<8x384xf32> to vector<8x128xf32>
    %97 = vector.extract_strided_slice %95 {offsets = [0, 128], sizes = [8, 128], strides = [1, 1]} : vector<8x384xf32> to vector<8x128xf32>
    %98 = vector.extract_strided_slice %95 {offsets = [0, 256], sizes = [8, 128], strides = [1, 1]} : vector<8x384xf32> to vector<8x128xf32>
    %99 = vector.extract_strided_slice %89 {offsets = [0, 384], sizes = [8, 128], strides = [1, 1]} : vector<8x512xf32> to vector<8x128xf32>
    %100 = math.tanh %99 : vector<8x128xf32>
    %101 = arith.mulf %97, %77 : vector<8x128xf32>
    %102 = arith.mulf %96, %100 : vector<8x128xf32>
    %103 = arith.addf %101, %102 : vector<8x128xf32>
    %104 = math.tanh %103 : vector<8x128xf32>
    %105 = arith.mulf %98, %104 : vector<8x128xf32>
    %c3_37 = arith.constant 3 : index
    %c0_38 = arith.constant 0 : index
    %c0_39 = arith.constant 0 : index
    %106 = vector.load %arg3[%c3_37, %c0_38, %c0_39] : memref<8x8x128xf32, #tpu.memory_space<vmem>>, vector<1x8x128xf32>
    %107 = vector.shape_cast %106 : vector<1x8x128xf32> to vector<8x128xf32>
    %108 = vector.shape_cast %105 : vector<8x128xf32> to vector<1x8x128xf32>
    tpu.vector_store %arg3[%c3_37, %c0_38, %c0_39], %108 {strides = array<i32>} : memref<8x8x128xf32, #tpu.memory_space<vmem>>, vector<1x8x128xf32>,
    %109 = arith.truncf %105 : vector<8x128xf32> to vector<8x128xbf16>
    %c0_40 = arith.constant 0 : index
    %c0_41 = arith.constant 0 : index
    %110 = vector.load %arg2[%c0_40, %c0_41] : memref<128x512xbf16, #tpu.memory_space<vmem>>, vector<128x512xbf16>
    %cst_42 = arith.constant dense<0.000000e+00> : vector<8x512xf32>
    %111 = tpu.matmul %109, %110, %cst_42 {dimension_numbers = #tpu.dot_dimension_numbers<[1], [0], [0], [1], [0, 0, 1, 1], [], []>} : vector<8x128xbf16>, vector<128x512xbf16>, vector<8x512xf32> -> vector<8x512xf32>
    %c4 = arith.constant 4 : index
    %c0_43 = arith.constant 0 : index
    %c0_44 = arith.constant 0 : index
    %112 = vector.load %arg1[%c4, %c0_43, %c0_44] : memref<8x8x512xbf16, #tpu.memory_space<vmem>>, vector<1x8x512xbf16>
    %113 = vector.shape_cast %112 : vector<1x8x512xbf16> to vector<8x512xbf16>
    %114 = arith.extf %113 : vector<8x512xbf16> to vector<8x512xf32>
    %115 = arith.addf %114, %111 : vector<8x512xf32>
    %116 = vector.extract_strided_slice %115 {offsets = [0, 0], sizes = [8, 384], strides = [1, 1]} : vector<8x512xf32> to vector<8x384xf32>
    %117 = arith.negf %116 : vector<8x384xf32>
    %118 = math.exp %117 : vector<8x384xf32>
    %cst_45 = arith.constant 1.000000e+00 : f32
    %119 = vector.broadcast %cst_45 : f32 to vector<8x384xf32>
    %120 = arith.addf %119, %118 : vector<8x384xf32>
    %121 = arith.divf %119, %120 : vector<8x384xf32>
    %122 = vector.extract_strided_slice %121 {offsets = [0, 0], sizes = [8, 128], strides = [1, 1]} : vector<8x384xf32> to vector<8x128xf32>
    %123 = vector.extract_strided_slice %121 {offsets = [0, 128], sizes = [8, 128], strides = [1, 1]} : vector<8x384xf32> to vector<8x128xf32>
    %124 = vector.extract_strided_slice %121 {offsets = [0, 256], sizes = [8, 128], strides = [1, 1]} : vector<8x384xf32> to vector<8x128xf32>
    %125 = vector.extract_strided_slice %115 {offsets = [0, 384], sizes = [8, 128], strides = [1, 1]} : vector<8x512xf32> to vector<8x128xf32>
    %126 = math.tanh %125 : vector<8x128xf32>
    %127 = arith.mulf %123, %103 : vector<8x128xf32>
    %128 = arith.mulf %122, %126 : vector<8x128xf32>
    %129 = arith.addf %127, %128 : vector<8x128xf32>
    %130 = math.tanh %129 : vector<8x128xf32>
    %131 = arith.mulf %124, %130 : vector<8x128xf32>
    %c4_46 = arith.constant 4 : index
    %c0_47 = arith.constant 0 : index
    %c0_48 = arith.constant 0 : index
    %132 = vector.load %arg3[%c4_46, %c0_47, %c0_48] : memref<8x8x128xf32, #tpu.memory_space<vmem>>, vector<1x8x128xf32>
    %133 = vector.shape_cast %132 : vector<1x8x128xf32> to vector<8x128xf32>
    %134 = vector.shape_cast %131 : vector<8x128xf32> to vector<1x8x128xf32>
    tpu.vector_store %arg3[%c4_46, %c0_47, %c0_48], %134 {strides = array<i32>} : memref<8x8x128xf32, #tpu.memory_space<vmem>>, vector<1x8x128xf32>,
    %135 = arith.truncf %131 : vector<8x128xf32> to vector<8x128xbf16>
    %c0_49 = arith.constant 0 : index
    %c0_50 = arith.constant 0 : index
    %136 = vector.load %arg2[%c0_49, %c0_50] : memref<128x512xbf16, #tpu.memory_space<vmem>>, vector<128x512xbf16>
    %cst_51 = arith.constant dense<0.000000e+00> : vector<8x512xf32>
    %137 = tpu.matmul %135, %136, %cst_51 {dimension_numbers = #tpu.dot_dimension_numbers<[1], [0], [0], [1], [0, 0, 1, 1], [], []>} : vector<8x128xbf16>, vector<128x512xbf16>, vector<8x512xf32> -> vector<8x512xf32>
    %c5 = arith.constant 5 : index
    %c0_52 = arith.constant 0 : index
    %c0_53 = arith.constant 0 : index
    %138 = vector.load %arg1[%c5, %c0_52, %c0_53] : memref<8x8x512xbf16, #tpu.memory_space<vmem>>, vector<1x8x512xbf16>
    %139 = vector.shape_cast %138 : vector<1x8x512xbf16> to vector<8x512xbf16>
    %140 = arith.extf %139 : vector<8x512xbf16> to vector<8x512xf32>
    %141 = arith.addf %140, %137 : vector<8x512xf32>
    %142 = vector.extract_strided_slice %141 {offsets = [0, 0], sizes = [8, 384], strides = [1, 1]} : vector<8x512xf32> to vector<8x384xf32>
    %143 = arith.negf %142 : vector<8x384xf32>
    %144 = math.exp %143 : vector<8x384xf32>
    %cst_54 = arith.constant 1.000000e+00 : f32
    %145 = vector.broadcast %cst_54 : f32 to vector<8x384xf32>
    %146 = arith.addf %145, %144 : vector<8x384xf32>
    %147 = arith.divf %145, %146 : vector<8x384xf32>
    %148 = vector.extract_strided_slice %147 {offsets = [0, 0], sizes = [8, 128], strides = [1, 1]} : vector<8x384xf32> to vector<8x128xf32>
    %149 = vector.extract_strided_slice %147 {offsets = [0, 128], sizes = [8, 128], strides = [1, 1]} : vector<8x384xf32> to vector<8x128xf32>
    %150 = vector.extract_strided_slice %147 {offsets = [0, 256], sizes = [8, 128], strides = [1, 1]} : vector<8x384xf32> to vector<8x128xf32>
    %151 = vector.extract_strided_slice %141 {offsets = [0, 384], sizes = [8, 128], strides = [1, 1]} : vector<8x512xf32> to vector<8x128xf32>
    %152 = math.tanh %151 : vector<8x128xf32>
    %153 = arith.mulf %149, %129 : vector<8x128xf32>
    %154 = arith.mulf %148, %152 : vector<8x128xf32>
    %155 = arith.addf %153, %154 : vector<8x128xf32>
    %156 = math.tanh %155 : vector<8x128xf32>
    %157 = arith.mulf %150, %156 : vector<8x128xf32>
    %c5_55 = arith.constant 5 : index
    %c0_56 = arith.constant 0 : index
    %c0_57 = arith.constant 0 : index
    %158 = vector.load %arg3[%c5_55, %c0_56, %c0_57] : memref<8x8x128xf32, #tpu.memory_space<vmem>>, vector<1x8x128xf32>
    %159 = vector.shape_cast %158 : vector<1x8x128xf32> to vector<8x128xf32>
    %160 = vector.shape_cast %157 : vector<8x128xf32> to vector<1x8x128xf32>
    tpu.vector_store %arg3[%c5_55, %c0_56, %c0_57], %160 {strides = array<i32>} : memref<8x8x128xf32, #tpu.memory_space<vmem>>, vector<1x8x128xf32>,
    %161 = arith.truncf %157 : vector<8x128xf32> to vector<8x128xbf16>
    %c0_58 = arith.constant 0 : index
    %c0_59 = arith.constant 0 : index
    %162 = vector.load %arg2[%c0_58, %c0_59] : memref<128x512xbf16, #tpu.memory_space<vmem>>, vector<128x512xbf16>
    %cst_60 = arith.constant dense<0.000000e+00> : vector<8x512xf32>
    %163 = tpu.matmul %161, %162, %cst_60 {dimension_numbers = #tpu.dot_dimension_numbers<[1], [0], [0], [1], [0, 0, 1, 1], [], []>} : vector<8x128xbf16>, vector<128x512xbf16>, vector<8x512xf32> -> vector<8x512xf32>
    %c6 = arith.constant 6 : index
    %c0_61 = arith.constant 0 : index
    %c0_62 = arith.constant 0 : index
    %164 = vector.load %arg1[%c6, %c0_61, %c0_62] : memref<8x8x512xbf16, #tpu.memory_space<vmem>>, vector<1x8x512xbf16>
    %165 = vector.shape_cast %164 : vector<1x8x512xbf16> to vector<8x512xbf16>
    %166 = arith.extf %165 : vector<8x512xbf16> to vector<8x512xf32>
    %167 = arith.addf %166, %163 : vector<8x512xf32>
    %168 = vector.extract_strided_slice %167 {offsets = [0, 0], sizes = [8, 384], strides = [1, 1]} : vector<8x512xf32> to vector<8x384xf32>
    %169 = arith.negf %168 : vector<8x384xf32>
    %170 = math.exp %169 : vector<8x384xf32>
    %cst_63 = arith.constant 1.000000e+00 : f32
    %171 = vector.broadcast %cst_63 : f32 to vector<8x384xf32>
    %172 = arith.addf %171, %170 : vector<8x384xf32>
    %173 = arith.divf %171, %172 : vector<8x384xf32>
    %174 = vector.extract_strided_slice %173 {offsets = [0, 0], sizes = [8, 128], strides = [1, 1]} : vector<8x384xf32> to vector<8x128xf32>
    %175 = vector.extract_strided_slice %173 {offsets = [0, 128], sizes = [8, 128], strides = [1, 1]} : vector<8x384xf32> to vector<8x128xf32>
    %176 = vector.extract_strided_slice %173 {offsets = [0, 256], sizes = [8, 128], strides = [1, 1]} : vector<8x384xf32> to vector<8x128xf32>
    %177 = vector.extract_strided_slice %167 {offsets = [0, 384], sizes = [8, 128], strides = [1, 1]} : vector<8x512xf32> to vector<8x128xf32>
    %178 = math.tanh %177 : vector<8x128xf32>
    %179 = arith.mulf %175, %155 : vector<8x128xf32>
    %180 = arith.mulf %174, %178 : vector<8x128xf32>
    %181 = arith.addf %179, %180 : vector<8x128xf32>
    %182 = math.tanh %181 : vector<8x128xf32>
    %183 = arith.mulf %176, %182 : vector<8x128xf32>
    %c6_64 = arith.constant 6 : index
    %c0_65 = arith.constant 0 : index
    %c0_66 = arith.constant 0 : index
    %184 = vector.load %arg3[%c6_64, %c0_65, %c0_66] : memref<8x8x128xf32, #tpu.memory_space<vmem>>, vector<1x8x128xf32>
    %185 = vector.shape_cast %184 : vector<1x8x128xf32> to vector<8x128xf32>
    %186 = vector.shape_cast %183 : vector<8x128xf32> to vector<1x8x128xf32>
    tpu.vector_store %arg3[%c6_64, %c0_65, %c0_66], %186 {strides = array<i32>} : memref<8x8x128xf32, #tpu.memory_space<vmem>>, vector<1x8x128xf32>,
    %187 = arith.truncf %183 : vector<8x128xf32> to vector<8x128xbf16>
    %c0_67 = arith.constant 0 : index
    %c0_68 = arith.constant 0 : index
    %188 = vector.load %arg2[%c0_67, %c0_68] : memref<128x512xbf16, #tpu.memory_space<vmem>>, vector<128x512xbf16>
    %cst_69 = arith.constant dense<0.000000e+00> : vector<8x512xf32>
    %189 = tpu.matmul %187, %188, %cst_69 {dimension_numbers = #tpu.dot_dimension_numbers<[1], [0], [0], [1], [0, 0, 1, 1], [], []>} : vector<8x128xbf16>, vector<128x512xbf16>, vector<8x512xf32> -> vector<8x512xf32>
    %c7 = arith.constant 7 : index
    %c0_70 = arith.constant 0 : index
    %c0_71 = arith.constant 0 : index
    %190 = vector.load %arg1[%c7, %c0_70, %c0_71] : memref<8x8x512xbf16, #tpu.memory_space<vmem>>, vector<1x8x512xbf16>
    %191 = vector.shape_cast %190 : vector<1x8x512xbf16> to vector<8x512xbf16>
    %192 = arith.extf %191 : vector<8x512xbf16> to vector<8x512xf32>
    %193 = arith.addf %192, %189 : vector<8x512xf32>
    %194 = vector.extract_strided_slice %193 {offsets = [0, 0], sizes = [8, 384], strides = [1, 1]} : vector<8x512xf32> to vector<8x384xf32>
    %195 = arith.negf %194 : vector<8x384xf32>
    %196 = math.exp %195 : vector<8x384xf32>
    %cst_72 = arith.constant 1.000000e+00 : f32
    %197 = vector.broadcast %cst_72 : f32 to vector<8x384xf32>
    %198 = arith.addf %197, %196 : vector<8x384xf32>
    %199 = arith.divf %197, %198 : vector<8x384xf32>
    %200 = vector.extract_strided_slice %199 {offsets = [0, 0], sizes = [8, 128], strides = [1, 1]} : vector<8x384xf32> to vector<8x128xf32>
    %201 = vector.extract_strided_slice %199 {offsets = [0, 128], sizes = [8, 128], strides = [1, 1]} : vector<8x384xf32> to vector<8x128xf32>
    %202 = vector.extract_strided_slice %199 {offsets = [0, 256], sizes = [8, 128], strides = [1, 1]} : vector<8x384xf32> to vector<8x128xf32>
    %203 = vector.extract_strided_slice %193 {offsets = [0, 384], sizes = [8, 128], strides = [1, 1]} : vector<8x512xf32> to vector<8x128xf32>
    %204 = math.tanh %203 : vector<8x128xf32>
    %205 = arith.mulf %201, %181 : vector<8x128xf32>
    %206 = arith.mulf %200, %204 : vector<8x128xf32>
    %207 = arith.addf %205, %206 : vector<8x128xf32>
    %208 = math.tanh %207 : vector<8x128xf32>
    %209 = arith.mulf %202, %208 : vector<8x128xf32>
    %c7_73 = arith.constant 7 : index
    %c0_74 = arith.constant 0 : index
    %c0_75 = arith.constant 0 : index
    %210 = vector.load %arg3[%c7_73, %c0_74, %c0_75] : memref<8x8x128xf32, #tpu.memory_space<vmem>>, vector<1x8x128xf32>
    %211 = vector.shape_cast %210 : vector<1x8x128xf32> to vector<8x128xf32>
    %212 = vector.shape_cast %209 : vector<8x128xf32> to vector<1x8x128xf32>
    tpu.vector_store %arg3[%c7_73, %c0_74, %c0_75], %212 {strides = array<i32>} : memref<8x8x128xf32, #tpu.memory_space<vmem>>, vector<1x8x128xf32>,
    %c0_76 = arith.constant 0 : index
    %c0_77 = arith.constant 0 : index
    %213 = vector.load %arg4[%c0_76, %c0_77] : memref<8x128xf32, #tpu.memory_space<vmem>>, vector<8x128xf32>
    tpu.vector_store %arg4[%c0_76, %c0_77], %209 {strides = array<i32>} : memref<8x128xf32, #tpu.memory_space<vmem>>, vector<8x128xf32>,
    %c0_78 = arith.constant 0 : index
    %c0_79 = arith.constant 0 : index
    %214 = vector.load %arg5[%c0_78, %c0_79] : memref<8x128xf32, #tpu.memory_space<vmem>>, vector<8x128xf32>
    tpu.vector_store %arg5[%c0_78, %c0_79], %207 {strides = array<i32>} : memref<8x128xf32, #tpu.memory_space<vmem>>, vector<8x128xf32>,
    return
  }
  func.func @transform_0(%arg0: i32) -> (i32, i32, i32) {
    %c0_i32 = arith.constant 0 : i32
    %c0_i32_0 = arith.constant 0 : i32
    %c0_i32_1 = arith.constant 0 : i32
    return %arg0, %c0_i32, %c0_i32_0 : i32, i32, i32
  }
  func.func @transform_1(%arg0: i32) -> (i32, i32) {
    %c0_i32 = arith.constant 0 : i32
    %c0_i32_0 = arith.constant 0 : i32
    %c0_i32_1 = arith.constant 0 : i32
    return %c0_i32, %c0_i32_0 : i32, i32
  }
  func.func @transform_2(%arg0: i32) -> (i32, i32, i32) {
    %c0_i32 = arith.constant 0 : i32
    %c0_i32_0 = arith.constant 0 : i32
    %c0_i32_1 = arith.constant 0 : i32
    return %arg0, %c0_i32, %c0_i32_0 : i32, i32, i32
  }
}

</mosaic_0001>

<llo_original>
// kernel: p_ann_lstm_forward.1
$region0: #{p_ann_lstm_forward.1}
  #allocation0 [shape = 'u32[]', space=smem, size = 0x4, offset = 0x4, fixed_abs, tag = 'smem constant byte address 0x4 - core index']
  #allocation1 [shape = 'u32[144,128]{1,0:T(1,128)}', space=vmem, size = 0x12000, scoped, tag = 'internal scratch']
  #allocation2 [shape = 'f32[8,128]{1,0:T(8,128)}', space=vmem, size = 0x1000, scoped, tag = 'scratch operand']
  #allocation3 [shape = 'f32[8,128]{1,0:T(8,128)}', space=vmem, size = 0x1000, scoped, tag = 'scratch operand']
  %s0 = inlined_call_operand.vmem [shape: bf16[8,8,512], index: 0, kind: input, shape index: {}]
  %s1 = inlined_call_operand.vmem [shape: bf16[128,512], index: 1, kind: input, shape index: {}]
  %s2 = inlined_call_operand.vmem [shape: f32[8,8,128], index: 2, kind: output, shape index: {}]
  %s3 = sld [smem:[#allocation0]]
  $region22: #{p_ann_lstm_forward.1} parent=0
    _
  %s5 = ssub.s32 1, %s3
  %s6 = scalar_select 0, %s5, %s3
  // Predicated region
  $region2: #{p_ann_lstm_forward.1} parent=0 // pred_check
    _
  $region3: #{p_ann_lstm_forward.1} parent=0 // pred_check_branch
    %8 = sbr.rel (0) target = $region5
  $region4: #{p_ann_lstm_forward.1} parent=0 // pred_region
    _
  $region5: #{p_ann_lstm_forward.1} parent=0 // pred_fallthru
    _
  // Predicated region
  $region6: #{p_ann_lstm_forward.1} parent=0 // pred_check
    _
  $region7: #{p_ann_lstm_forward.1} parent=0 // pred_check_branch
    %10 = sbr.rel (0) target = $region9
  $region8: #{p_ann_lstm_forward.1} parent=0 // pred_region
    _
  $region9: #{p_ann_lstm_forward.1} parent=0 // pred_fallthru
    _
  %p12 = scmp.eq.s32.totalorder 0, 0
  // Predicated region
  $region10: #{p_ann_lstm_forward.1} parent=0 // pred_check
    %p13 = pneg %p12
  $region11: #{p_ann_lstm_forward.1} parent=0 // pred_check_branch
    %15 = sbr.rel (%p13) target = $region13
  $region12: #{p_ann_lstm_forward.1} parent=0 // pred_region
    %16 = vst [vmem:[#allocation2] sm:$0xff] 0.0
    %17 = vst [vmem:[#allocation3] sm:$0xff] 0.0
  $region13: #{p_ann_lstm_forward.1} parent=0 // pred_fallthru
    _
  %v18 = vld [vmem:[#allocation2] sm:$0xff]
  %v19 = vld [vmem:[#allocation3] sm:$0xff]
  %v20 = vpack.c.bf16 %v18, %v18
  %v21 = vld [vmem:[%s1] sm:$0xff]
  %v22 = vld [vmem:[%s1 + $0x8] sm:$0xff]
  %v23 = vld [vmem:[%s1 + $0x10] sm:$0xff]
  %v24 = vld [vmem:[%s1 + $0x18] sm:$0xff]
  %v25 = vld [vmem:[%s1 + $0x20] sm:$0xff]
  %v26 = vld [vmem:[%s1 + $0x28] sm:$0xff]
  %v27 = vld [vmem:[%s1 + $0x30] sm:$0xff]
  %v28 = vld [vmem:[%s1 + $0x38] sm:$0xff]
  %v29 = vld [vmem:[%s1 + $0x40] sm:$0xff]
  %v30 = vld [vmem:[%s1 + $0x48] sm:$0xff]
  %v31 = vld [vmem:[%s1 + $0x50] sm:$0xff]
  %v32 = vld [vmem:[%s1 + $0x58] sm:$0xff]
  %v33 = vld [vmem:[%s1 + $0x60] sm:$0xff]
  %v34 = vld [vmem:[%s1 + $0x68] sm:$0xff]
  %v35 = vld [vmem:[%s1 + $0x70] sm:$0xff]
  %v36 = vld [vmem:[%s1 + $0x78] sm:$0xff]
  %v37 = vld [vmem:[%s1 + $0x80] sm:$0xff]
  %v38 = vld [vmem:[%s1 + $0x88] sm:$0xff]
  %v39 = vld [vmem:[%s1 + $0x90] sm:$0xff]
  %v40 = vld [vmem:[%s1 + $0x98] sm:$0xff]
  %v41 = vld [vmem:[%s1 + $0xa0] sm:$0xff]
  %v42 = vld [vmem:[%s1 + $0xa8] sm:$0xff]
  %v43 = vld [vmem:[%s1 + $0xb0] sm:$0xff]
  %v44 = vld [vmem:[%s1 + $0xb8] sm:$0xff]
  %v45 = vld [vmem:[%s1 + $0xc0] sm:$0xff]
  %v46 = vld [vmem:[%s1 + $0xc8] sm:$0xff]
  %v47 = vld [vmem:[%s1 + $0xd0] sm:$0xff]
  %v48 = vld [vmem:[%s1 + $0xd8] sm:$0xff]
  %v49 = vld [vmem:[%s1 + $0xe0] sm:$0xff]
  %v50 = vld [vmem:[%s1 + $0xe8] sm:$0xff]
  %v51 = vld [vmem:[%s1 + $0xf0] sm:$0xff]
  %v52 = vld [vmem:[%s1 + $0xf8] sm:$0xff]
  %v85 = vunpack.c.l.b16 %v21
  %v86 = vunpack.c.h.b16 %v21
  %v87 = vunpack.c.l.b16 %v22
  %v88 = vunpack.c.h.b16 %v22
  %v89 = vunpack.c.l.b16 %v23
  %v90 = vunpack.c.h.b16 %v23
  %v91 = vunpack.c.l.b16 %v24
  %v92 = vunpack.c.h.b16 %v24
  %v93 = vunpack.c.l.b16 %v25
  %v94 = vunpack.c.h.b16 %v25
  %v95 = vunpack.c.l.b16 %v26
  %v96 = vunpack.c.h.b16 %v26
  %v97 = vunpack.c.l.b16 %v27
  %v98 = vunpack.c.h.b16 %v27
  %v99 = vunpack.c.l.b16 %v28
  %v100 = vunpack.c.h.b16 %v28
  %v101 = vunpack.c.l.b16 %v29
  %v102 = vunpack.c.h.b16 %v29
  %v103 = vunpack.c.l.b16 %v30
  %v104 = vunpack.c.h.b16 %v30
  %v105 = vunpack.c.l.b16 %v31
  %v106 = vunpack.c.h.b16 %v31
  %v107 = vunpack.c.l.b16 %v32
  %v108 = vunpack.c.h.b16 %v32
  %v109 = vunpack.c.l.b16 %v33
  %v110 = vunpack.c.h.b16 %v33
  %v111 = vunpack.c.l.b16 %v34
  %v112 = vunpack.c.h.b16 %v34
  %v113 = vunpack.c.l.b16 %v35
  %v114 = vunpack.c.h.b16 %v35
  %v115 = vunpack.c.l.b16 %v36
  %v116 = vunpack.c.h.b16 %v36
  %v117 = vunpack.c.l.b16 %v37
  %v118 = vunpack.c.h.b16 %v37
  %v119 = vunpack.c.l.b16 %v38
  %v120 = vunpack.c.h.b16 %v38
  %v121 = vunpack.c.l.b16 %v39
  %v122 = vunpack.c.h.b16 %v39
  %v123 = vunpack.c.l.b16 %v40
  %v124 = vunpack.c.h.b16 %v40
  %v125 = vunpack.c.l.b16 %v41
  %v126 = vunpack.c.h.b16 %v41
  %v127 = vunpack.c.l.b16 %v42
  %v128 = vunpack.c.h.b16 %v42
  %v129 = vunpack.c.l.b16 %v43
  %v130 = vunpack.c.h.b16 %v43
  %v131 = vunpack.c.l.b16 %v44
  %v132 = vunpack.c.h.b16 %v44
  %v133 = vunpack.c.l.b16 %v45
  %v134 = vunpack.c.h.b16 %v45
  %v135 = vunpack.c.l.b16 %v46
  %v136 = vunpack.c.h.b16 %v46
  %v137 = vunpack.c.l.b16 %v47
  %v138 = vunpack.c.h.b16 %v47
  %v139 = vunpack.c.l.b16 %v48
  %v140 = vunpack.c.h.b16 %v48
  %v141 = vunpack.c.l.b16 %v49
  %v142 = vunpack.c.h.b16 %v49
  %v143 = vunpack.c.l.b16 %v50
  %v144 = vunpack.c.h.b16 %v50
  %v145 = vunpack.c.l.b16 %v51
  %v146 = vunpack.c.h.b16 %v51
  %v147 = vunpack.c.l.b16 %v52
  %v148 = vunpack.c.h.b16 %v52
  %v149 = vpack.c.b16 %v89, %v85
  %v150 = vpack.c.b16 %v90, %v86
  %v151 = vpack.c.b16 %v91, %v87
  %v152 = vpack.c.b16 %v92, %v88
  %v153 = vpack.c.b16 %v97, %v93
  %v154 = vpack.c.b16 %v98, %v94
  %v155 = vpack.c.b16 %v99, %v95
  %v156 = vpack.c.b16 %v100, %v96
  %v157 = vpack.c.b16 %v105, %v101
  %v158 = vpack.c.b16 %v106, %v102
  %v159 = vpack.c.b16 %v107, %v103
  %v160 = vpack.c.b16 %v108, %v104
  %v161 = vpack.c.b16 %v113, %v109
  %v162 = vpack.c.b16 %v114, %v110
  %v163 = vpack.c.b16 %v115, %v111
  %v164 = vpack.c.b16 %v116, %v112
  %v165 = vpack.c.b16 %v121, %v117
  %v166 = vpack.c.b16 %v122, %v118
  %v167 = vpack.c.b16 %v123, %v119
  %v168 = vpack.c.b16 %v124, %v120
  %v169 = vpack.c.b16 %v129, %v125
  %v170 = vpack.c.b16 %v130, %v126
  %v171 = vpack.c.b16 %v131, %v127
  %v172 = vpack.c.b16 %v132, %v128
  %v173 = vpack.c.b16 %v137, %v133
  %v174 = vpack.c.b16 %v138, %v134
  %v175 = vpack.c.b16 %v139, %v135
  %v176 = vpack.c.b16 %v140, %v136
  %v177 = vpack.c.b16 %v145, %v141
  %v178 = vpack.c.b16 %v146, %v142
  %v179 = vpack.c.b16 %v147, %v143
  %v180 = vpack.c.b16 %v148, %v144
  %213 = vmatprep.subr.bf16.mxu0 %v150
  %214 = vmatpush1.bf16.msra.mxu0 %v149
  %215 = vmatprep.subr.bf16.mxu0 %v154
  %216 = vmatpush1.bf16.msra.mxu0 %v153
  %217 = vmatprep.subr.bf16.mxu0 %v158
  %218 = vmatpush1.bf16.msra.mxu0 %v157
  %219 = vmatprep.subr.bf16.mxu0 %v162
  %220 = vmatpush1.bf16.msra.mxu0 %v161
  %221 = vmatprep.subr.bf16.mxu0 %v166
  %222 = vmatpush1.bf16.msra.mxu0 %v165
  %223 = vmatprep.subr.bf16.mxu0 %v170
  %224 = vmatpush1.bf16.msra.mxu0 %v169
  %225 = vmatprep.subr.bf16.mxu0 %v174
  %226 = vmatpush1.bf16.msra.mxu0 %v173
  %227 = vmatprep.subr.bf16.mxu0 %v178
  %228 = vmatpush1.bf16.msra.mxu0 %v177
  %229 = vmatprep.subr.bf16.mxu0 0
  %230 = vmatpush1.bf16.msra.mxu0 0
  %231 = vmatprep.subr.bf16.mxu0 0
  %232 = vmatpush1.bf16.msra.mxu0 0
  %233 = vmatprep.subr.bf16.mxu0 0
  %234 = vmatpush1.bf16.msra.mxu0 0
  %235 = vmatprep.subr.bf16.mxu0 0
  %236 = vmatpush1.bf16.msra.mxu0 0
  %237 = vmatprep.subr.bf16.mxu0 0
  %238 = vmatpush1.bf16.msra.mxu0 0
  %239 = vmatprep.subr.bf16.mxu0 0
  %240 = vmatpush1.bf16.msra.mxu0 0
  %241 = vmatprep.subr.bf16.mxu0 0
  %242 = vmatpush1.bf16.msra.mxu0 0
  %243 = vmatprep.subr.bf16.mxu0 0
  %244 = vmatpush1.bf16.msra.mxu0 0
  %245 = vmatprep.mubr.bf16.mxu0 0
  %246 = vmatmul.mubr.bf16.gmra.mrb[0].mxu0 %v20
  %v247 = vpop.f32.mrb[0].mxu0
  %v248 = vadd.f32 0.0, %v247
  %v249 = vpop.f32.mrb[0].mxu0
  %v250 = vadd.f32 0.0, %v249
  %v251 = vpop.f32.mrb[0].mxu0
  %v252 = vpop.f32.mrb[0].mxu0
  %253 = vdwg.mxu0
  %254 = vmatprep.subr.bf16.mxu0 %v152
  %255 = vmatpush1.bf16.msra.mxu0 %v151
  %256 = vmatprep.subr.bf16.mxu0 %v156
  %257 = vmatpush1.bf16.msra.mxu0 %v155
  %258 = vmatprep.subr.bf16.mxu0 %v160
  %259 = vmatpush1.bf16.msra.mxu0 %v159
  %260 = vmatprep.subr.bf16.mxu0 %v164
  %261 = vmatpush1.bf16.msra.mxu0 %v163
  %262 = vmatprep.subr.bf16.mxu0 %v168
  %263 = vmatpush1.bf16.msra.mxu0 %v167
  %264 = vmatprep.subr.bf16.mxu0 %v172
  %265 = vmatpush1.bf16.msra.mxu0 %v171
  %266 = vmatprep.subr.bf16.mxu0 %v176
  %267 = vmatpush1.bf16.msra.mxu0 %v175
  %268 = vmatprep.subr.bf16.mxu0 %v180
  %269 = vmatpush1.bf16.msra.mxu0 %v179
  %270 = vmatprep.subr.bf16.mxu0 0
  %271 = vmatpush1.bf16.msra.mxu0 0
  %272 = vmatprep.subr.bf16.mxu0 0
  %273 = vmatpush1.bf16.msra.mxu0 0
  %274 = vmatprep.subr.bf16.mxu0 0
  %275 = vmatpush1.bf16.msra.mxu0 0
  %276 = vmatprep.subr.bf16.mxu0 0
  %277 = vmatpush1.bf16.msra.mxu0 0
  %278 = vmatprep.subr.bf16.mxu0 0
  %279 = vmatpush1.bf16.msra.mxu0 0
  %280 = vmatprep.subr.bf16.mxu0 0
  %281 = vmatpush1.bf16.msra.mxu0 0
  %282 = vmatprep.subr.bf16.mxu0 0
  %283 = vmatpush1.bf16.msra.mxu0 0
  %284 = vmatprep.subr.bf16.mxu0 0
  %285 = vmatpush1.bf16.msra.mxu0 0
  %286 = vmatprep.mubr.bf16.mxu0 0
  %287 = vmatmul.mubr.bf16.gmra.mrb[0].mxu0 %v20
  %v288 = vpop.f32.mrb[0].mxu0
  %v289 = vadd.f32 0.0, %v288
  %v290 = vpop.f32.mrb[0].mxu0
  %v291 = vadd.f32 0.0, %v290
  %v292 = vpop.f32.mrb[0].mxu0
  %v293 = vpop.f32.mrb[0].mxu0
  %294 = vdwg.mxu0
  %v295 = vld [vmem:[%s0] sm:$0xff]
  %v296 = vld [vmem:[%s0 + $0x8] sm:$0xff]
  %v297 = vunpack.c.l.bf16 %v295
  %v298 = vunpack.c.h.bf16 %v295
  %v299 = vunpack.c.l.bf16 %v296
  %v300 = vunpack.c.h.bf16 %v296
  %v301 = vadd.f32 %v297, %v248
  %v302 = vadd.f32 %v298, %v250
  %v303 = vadd.f32 %v299, %v289
  %v304 = vadd.f32 %v300, %v291
  %v305 = vxor.u32 %v301, 2147483648
  %v306 = vxor.u32 %v302, 2147483648
  %v307 = vxor.u32 %v303, 2147483648
  %v308 = vmul.f32 %v305, 1.442695
  %v309 = vpow.pop %v308
  %v310 = vmul.f32 %v306, 1.442695
  %v311 = vpow.pop %v310
  %v312 = vmul.f32 %v307, 1.442695
  %v313 = vpow.pop %v312
  %v314 = vadd.f32 %v309, 1.0
  %v315 = vadd.f32 %v311, 1.0
  %v316 = vadd.f32 %v313, 1.0
  %v317 = vrcp.pop %v314
  %v318 = vmul.f32 1.0, %v317
  %v319 = vrcp.pop %v315
  %v320 = vmul.f32 1.0, %v319
  %v321 = vrcp.pop %v316
  %v322 = vmul.f32 1.0, %v321
  %v323 = vtanh.pop %v304
  %v324 = vmul.f32 %v320, %v19
  %v325 = vmul.f32 %v318, %v323
  %v326 = vadd.f32 %v324, %v325
  %v327 = vtanh.pop %v326
  %v328 = vmul.f32 %v322, %v327
  %329 = vst [vmem:[%s2] sm:$0xff] %v328
  %v330 = vpack.c.bf16 %v328, %v328
  %v331 = vld [vmem:[%s1] sm:$0xff]
  %v332 = vld [vmem:[%s1 + $0x8] sm:$0xff]
  %v333 = vld [vmem:[%s1 + $0x10] sm:$0xff]
  %v334 = vld [vmem:[%s1 + $0x18] sm:$0xff]
  %v335 = vld [vmem:[%s1 + $0x20] sm:$0xff]
  %v336 = vld [vmem:[%s1 + $0x28] sm:$0xff]
  %v337 = vld [vmem:[%s1 + $0x30] sm:$0xff]
  %v338 = vld [vmem:[%s1 + $0x38] sm:$0xff]
  %v339 = vld [vmem:[%s1 + $0x40] sm:$0xff]
  %v340 = vld [vmem:[%s1 + $0x48] sm:$0xff]
  %v341 = vld [vmem:[%s1 + $0x50] sm:$0xff]
  %v342 = vld [vmem:[%s1 + $0x58] sm:$0xff]
  %v343 = vld [vmem:[%s1 + $0x60] sm:$0xff]
  %v344 = vld [vmem:[%s1 + $0x68] sm:$0xff]
  %v345 = vld [vmem:[%s1 + $0x70] sm:$0xff]
  %v346 = vld [vmem:[%s1 + $0x78] sm:$0xff]
  %v347 = vld [vmem:[%s1 + $0x80] sm:$0xff]
  %v348 = vld [vmem:[%s1 + $0x88] sm:$0xff]
  %v349 = vld [vmem:[%s1 + $0x90] sm:$0xff]
  %v350 = vld [vmem:[%s1 + $0x98] sm:$0xff]
  %v351 = vld [vmem:[%s1 + $0xa0] sm:$0xff]
  %v352 = vld [vmem:[%s1 + $0xa8] sm:$0xff]
  %v353 = vld [vmem:[%s1 + $0xb0] sm:$0xff]
  %v354 = vld [vmem:[%s1 + $0xb8] sm:$0xff]
  %v355 = vld [vmem:[%s1 + $0xc0] sm:$0xff]
  %v356 = vld [vmem:[%s1 + $0xc8] sm:$0xff]
  %v357 = vld [vmem:[%s1 + $0xd0] sm:$0xff]
  %v358 = vld [vmem:[%s1 + $0xd8] sm:$0xff]
  %v359 = vld [vmem:[%s1 + $0xe0] sm:$0xff]
  %v360 = vld [vmem:[%s1 + $0xe8] sm:$0xff]
  %v361 = vld [vmem:[%s1 + $0xf0] sm:$0xff]
  %v362 = vld [vmem:[%s1 + $0xf8] sm:$0xff]
  %v395 = vunpack.c.l.b16 %v331
  %v396 = vunpack.c.h.b16 %v331
  %v397 = vunpack.c.l.b16 %v332
  %v398 = vunpack.c.h.b16 %v332
  %v399 = vunpack.c.l.b16 %v333
  %v400 = vunpack.c.h.b16 %v333
  %v401 = vunpack.c.l.b16 %v334
  %v402 = vunpack.c.h.b16 %v334
  %v403 = vunpack.c.l.b16 %v335
  %v404 = vunpack.c.h.b16 %v335
  %v405 = vunpack.c.l.b16 %v336
  %v406 = vunpack.c.h.b16 %v336
  %v407 = vunpack.c.l.b16 %v337
  %v408 = vunpack.c.h.b16 %v337
  %v409 = vunpack.c.l.b16 %v338
  %v410 = vunpack.c.h.b16 %v338
  %v411 = vunpack.c.l.b16 %v339
  %v412 = vunpack.c.h.b16 %v339
  %v413 = vunpack.c.l.b16 %v340
  %v414 = vunpack.c.h.b16 %v340
  %v415 = vunpack.c.l.b16 %v341
  %v416 = vunpack.c.h.b16 %v341
  %v417 = vunpack.c.l.b16 %v342
  %v418 = vunpack.c.h.b16 %v342
  %v419 = vunpack.c.l.b16 %v343
  %v420 = vunpack.c.h.b16 %v343
  %v421 = vunpack.c.l.b16 %v344
  %v422 = vunpack.c.h.b16 %v344
  %v423 = vunpack.c.l.b16 %v345
  %v424 = vunpack.c.h.b16 %v345
  %v425 = vunpack.c.l.b16 %v346
  %v426 = vunpack.c.h.b16 %v346
  %v427 = vunpack.c.l.b16 %v347
  %v428 = vunpack.c.h.b16 %v347
  %v429 = vunpack.c.l.b16 %v348
  %v430 = vunpack.c.h.b16 %v348
  %v431 = vunpack.c.l.b16 %v349
  %v432 = vunpack.c.h.b16 %v349
  %v433 = vunpack.c.l.b16 %v350
  %v434 = vunpack.c.h.b16 %v350
  %v435 = vunpack.c.l.b16 %v351
  %v436 = vunpack.c.h.b16 %v351
  %v437 = vunpack.c.l.b16 %v352
  %v438 = vunpack.c.h.b16 %v352
  %v439 = vunpack.c.l.b16 %v353
  %v440 = vunpack.c.h.b16 %v353
  %v441 = vunpack.c.l.b16 %v354
  %v442 = vunpack.c.h.b16 %v354
  %v443 = vunpack.c.l.b16 %v355
  %v444 = vunpack.c.h.b16 %v355
  %v445 = vunpack.c.l.b16 %v356
  %v446 = vunpack.c.h.b16 %v356
  %v447 = vunpack.c.l.b16 %v357
  %v448 = vunpack.c.h.b16 %v357
  %v449 = vunpack.c.l.b16 %v358
  %v450 = vunpack.c.h.b16 %v358
  %v451 = vunpack.c.l.b16 %v359
  %v452 = vunpack.c.h.b16 %v359
  %v453 = vunpack.c.l.b16 %v360
  %v454 = vunpack.c.h.b16 %v360
  %v455 = vunpack.c.l.b16 %v361
  %v456 = vunpack.c.h.b16 %v361
  %v457 = vunpack.c.l.b16 %v362
  %v458 = vunpack.c.h.b16 %v362
  %v459 = vpack.c.b16 %v399, %v395
  %v460 = vpack.c.b16 %v400, %v396
  %v461 = vpack.c.b16 %v401, %v397
  %v462 = vpack.c.b16 %v402, %v398
  %v463 = vpack.c.b16 %v407, %v403
  %v464 = vpack.c.b16 %v408, %v404
  %v465 = vpack.c.b16 %v409, %v405
  %v466 = vpack.c.b16 %v410, %v406
  %v467 = vpack.c.b16 %v415, %v411
  %v468 = vpack.c.b16 %v416, %v412
  %v469 = vpack.c.b16 %v417, %v413
  %v470 = vpack.c.b16 %v418, %v414
  %v471 = vpack.c.b16 %v423, %v419
  %v472 = vpack.c.b16 %v424, %v420
  %v473 = vpack.c.b16 %v425, %v421
  %v474 = vpack.c.b16 %v426, %v422
  %v475 = vpack.c.b16 %v431, %v427
  %v476 = vpack.c.b16 %v432, %v428
  %v477 = vpack.c.b16 %v433, %v429
  %v478 = vpack.c.b16 %v434, %v430
  %v479 = vpack.c.b16 %v439, %v435
  %v480 = vpack.c.b16 %v440, %v436
  %v481 = vpack.c.b16 %v441, %v437
  %v482 = vpack.c.b16 %v442, %v438
  %v483 = vpack.c.b16 %v447, %v443
  %v484 = vpack.c.b16 %v448, %v444
  %v485 = vpack.c.b16 %v449, %v445
  %v486 = vpack.c.b16 %v450, %v446
  %v487 = vpack.c.b16 %v455, %v451
  %v488 = vpack.c.b16 %v456, %v452
  %v489 = vpack.c.b16 %v457, %v453
  %v490 = vpack.c.b16 %v458, %v454
  %523 = vmatprep.subr.bf16.mxu0 %v460
  %524 = vmatpush1.bf16.msra.mxu0 %v459
  %525 = vmatprep.subr.bf16.mxu0 %v464
  %526 = vmatpush1.bf16.msra.mxu0 %v463
  %527 = vmatprep.subr.bf16.mxu0 %v468
  %528 = vmatpush1.bf16.msra.mxu0 %v467
  %529 = vmatprep.subr.bf16.mxu0 %v472
  %530 = vmatpush1.bf16.msra.mxu0 %v471
  %531 = vmatprep.subr.bf16.mxu0 %v476
  %532 = vmatpush1.bf16.msra.mxu0 %v475
  %533 = vmatprep.subr.bf16.mxu0 %v480
  %534 = vmatpush1.bf16.msra.mxu0 %v479
  %535 = vmatprep.subr.bf16.mxu0 %v484
  %536 = vmatpush1.bf16.msra.mxu0 %v483
  %537 = vmatprep.subr.bf16.mxu0 %v488
  %538 = vmatpush1.bf16.msra.mxu0 %v487
  %539 = vmatprep.subr.bf16.mxu0 0
  %540 = vmatpush1.bf16.msra.mxu0 0
  %541 = vmatprep.subr.bf16.mxu0 0
  %542 = vmatpush1.bf16.msra.mxu0 0
  %543 = vmatprep.subr.bf16.mxu0 0
  %544 = vmatpush1.bf16.msra.mxu0 0
  %545 = vmatprep.subr.bf16.mxu0 0
  %546 = vmatpush1.bf16.msra.mxu0 0
  %547 = vmatprep.subr.bf16.mxu0 0
  %548 = vmatpush1.bf16.msra.mxu0 0
  %549 = vmatprep.subr.bf16.mxu0 0
  %550 = vmatpush1.bf16.msra.mxu0 0
  %551 = vmatprep.subr.bf16.mxu0 0
  %552 = vmatpush1.bf16.msra.mxu0 0
  %553 = vmatprep.subr.bf16.mxu0 0
  %554 = vmatpush1.bf16.msra.mxu0 0
  %555 = vmatprep.mubr.bf16.mxu0 0
  %556 = vmatmul.mubr.bf16.gmra.mrb[0].mxu0 %v330
  %v557 = vpop.f32.mrb[0].mxu0
  %v558 = vadd.f32 0.0, %v557
  %v559 = vpop.f32.mrb[0].mxu0
  %v560 = vadd.f32 0.0, %v559
  %v561 = vpop.f32.mrb[0].mxu0
  %v562 = vpop.f32.mrb[0].mxu0
  %563 = vdwg.mxu0
  %564 = vmatprep.subr.bf16.mxu0 %v462
  %565 = vmatpush1.bf16.msra.mxu0 %v461
  %566 = vmatprep.subr.bf16.mxu0 %v466
  %567 = vmatpush1.bf16.msra.mxu0 %v465
  %568 = vmatprep.subr.bf16.mxu0 %v470
  %569 = vmatpush1.bf16.msra.mxu0 %v469
  %570 = vmatprep.subr.bf16.mxu0 %v474
  %571 = vmatpush1.bf16.msra.mxu0 %v473
  %572 = vmatprep.subr.bf16.mxu0 %v478
  %573 = vmatpush1.bf16.msra.mxu0 %v477
  %574 = vmatprep.subr.bf16.mxu0 %v482
  %575 = vmatpush1.bf16.msra.mxu0 %v481
  %576 = vmatprep.subr.bf16.mxu0 %v486
  %577 = vmatpush1.bf16.msra.mxu0 %v485
  %578 = vmatprep.subr.bf16.mxu0 %v490
  %579 = vmatpush1.bf16.msra.mxu0 %v489
  %580 = vmatprep.subr.bf16.mxu0 0
  %581 = vmatpush1.bf16.msra.mxu0 0
  %582 = vmatprep.subr.bf16.mxu0 0
  %583 = vmatpush1.bf16.msra.mxu0 0
  %584 = vmatprep.subr.bf16.mxu0 0
  %585 = vmatpush1.bf16.msra.mxu0 0
  %586 = vmatprep.subr.bf16.mxu0 0
  %587 = vmatpush1.bf16.msra.mxu0 0
  %588 = vmatprep.subr.bf16.mxu0 0
  %589 = vmatpush1.bf16.msra.mxu0 0
  %590 = vmatprep.subr.bf16.mxu0 0
  %591 = vmatpush1.bf16.msra.mxu0 0
  %592 = vmatprep.subr.bf16.mxu0 0
  %593 = vmatpush1.bf16.msra.mxu0 0
  %594 = vmatprep.subr.bf16.mxu0 0
  %595 = vmatpush1.bf16.msra.mxu0 0
  %596 = vmatprep.mubr.bf16.mxu0 0
  %597 = vmatmul.mubr.bf16.gmra.mrb[0].mxu0 %v330
  %v598 = vpop.f32.mrb[0].mxu0
  %v599 = vadd.f32 0.0, %v598
  %v600 = vpop.f32.mrb[0].mxu0
  %v601 = vadd.f32 0.0, %v600
  %v602 = vpop.f32.mrb[0].mxu0
  %v603 = vpop.f32.mrb[0].mxu0
  %604 = vdwg.mxu0
  %s605 = scalar_lea.vmem %s0, 16
  %v606 = vld [vmem:[%s605] sm:$0xff]
  %v607 = vld [vmem:[%s605 + $0x8] sm:$0xff]
  %v608 = vunpack.c.l.bf16 %v606
  %v609 = vunpack.c.h.bf16 %v606
  %v610 = vunpack.c.l.bf16 %v607
  %v611 = vunpack.c.h.bf16 %v607
  %v612 = vadd.f32 %v608, %v558
  %v613 = vadd.f32 %v609, %v560
  %v614 = vadd.f32 %v610, %v599
  %v615 = vadd.f32 %v611, %v601
  %v616 = vxor.u32 %v612, 2147483648
  %v617 = vxor.u32 %v613, 2147483648
  %v618 = vxor.u32 %v614, 2147483648
  %v619 = vmul.f32 %v616, 1.442695
  %v620 = vpow.pop %v619
  %v621 = vmul.f32 %v617, 1.442695
  %v622 = vpow.pop %v621
  %v623 = vmul.f32 %v618, 1.442695
  %v624 = vpow.pop %v623
  %v625 = vadd.f32 %v620, 1.0
  %v626 = vadd.f32 %v622, 1.0
  %v627 = vadd.f32 %v624, 1.0
  %v628 = vrcp.pop %v625
  %v629 = vmul.f32 1.0, %v628
  %v630 = vrcp.pop %v626
  %v631 = vmul.f32 1.0, %v630
  %v632 = vrcp.pop %v627
  %v633 = vmul.f32 1.0, %v632
  %v634 = vtanh.pop %v615
  %v635 = vmul.f32 %v631, %v326
  %v636 = vmul.f32 %v629, %v634
  %v637 = vadd.f32 %v635, %v636
  %v638 = vtanh.pop %v637
  %v639 = vmul.f32 %v633, %v638
  %s640 = scalar_lea.vmem %s2, 8
  %641 = vst [vmem:[%s640] sm:$0xff] %v639
  %v642 = vpack.c.bf16 %v639, %v639
  %v643 = vld [vmem:[%s1] sm:$0xff]
  %v644 = vld [vmem:[%s1 + $0x8] sm:$0xff]
  %v645 = vld [vmem:[%s1 + $0x10] sm:$0xff]
  %v646 = vld [vmem:[%s1 + $0x18] sm:$0xff]
  %v647 = vld [vmem:[%s1 + $0x20] sm:$0xff]
  %v648 = vld [vmem:[%s1 + $0x28] sm:$0xff]
  %v649 = vld [vmem:[%s1 + $0x30] sm:$0xff]
  %v650 = vld [vmem:[%s1 + $0x38] sm:$0xff]
  %v651 = vld [vmem:[%s1 + $0x40] sm:$0xff]
  %v652 = vld [vmem:[%s1 + $0x48] sm:$0xff]
  %v653 = vld [vmem:[%s1 + $0x50] sm:$0xff]
  %v654 = vld [vmem:[%s1 + $0x58] sm:$0xff]
  %v655 = vld [vmem:[%s1 + $0x60] sm:$0xff]
  %v656 = vld [vmem:[%s1 + $0x68] sm:$0xff]
  %v657 = vld [vmem:[%s1 + $0x70] sm:$0xff]
  %v658 = vld [vmem:[%s1 + $0x78] sm:$0xff]
  %v659 = vld [vmem:[%s1 + $0x80] sm:$0xff]
  %v660 = vld [vmem:[%s1 + $0x88] sm:$0xff]
  %v661 = vld [vmem:[%s1 + $0x90] sm:$0xff]
  %v662 = vld [vmem:[%s1 + $0x98] sm:$0xff]
  %v663 = vld [vmem:[%s1 + $0xa0] sm:$0xff]
  %v664 = vld [vmem:[%s1 + $0xa8] sm:$0xff]
  %v665 = vld [vmem:[%s1 + $0xb0] sm:$0xff]
  %v666 = vld [vmem:[%s1 + $0xb8] sm:$0xff]
  %v667 = vld [vmem:[%s1 + $0xc0] sm:$0xff]
  %v668 = vld [vmem:[%s1 + $0xc8] sm:$0xff]
  %v669 = vld [vmem:[%s1 + $0xd0] sm:$0xff]
  %v670 = vld [vmem:[%s1 + $0xd8] sm:$0xff]
  %v671 = vld [vmem:[%s1 + $0xe0] sm:$0xff]
  %v672 = vld [vmem:[%s1 + $0xe8] sm:$0xff]
  %v673 = vld [vmem:[%s1 + $0xf0] sm:$0xff]
  %v674 = vld [vmem:[%s1 + $0xf8] sm:$0xff]
  %v707 = vunpack.c.l.b16 %v643
  %v708 = vunpack.c.h.b16 %v643
  %v709 = vunpack.c.l.b16 %v644
  %v710 = vunpack.c.h.b16 %v644
  %v711 = vunpack.c.l.b16 %v645
  %v712 = vunpack.c.h.b16 %v645
  %v713 = vunpack.c.l.b16 %v646
  %v714 = vunpack.c.h.b16 %v646
  %v715 = vunpack.c.l.b16 %v647
  %v716 = vunpack.c.h.b16 %v647
  %v717 = vunpack.c.l.b16 %v648
  %v718 = vunpack.c.h.b16 %v648
  %v719 = vunpack.c.l.b16 %v649
  %v720 = vunpack.c.h.b16 %v649
  %v721 = vunpack.c.l.b16 %v650
  %v722 = vunpack.c.h.b16 %v650
  %v723 = vunpack.c.l.b16 %v651
  %v724 = vunpack.c.h.b16 %v651
  %v725 = vunpack.c.l.b16 %v652
  %v726 = vunpack.c.h.b16 %v652
  %v727 = vunpack.c.l.b16 %v653
  %v728 = vunpack.c.h.b16 %v653
  %v729 = vunpack.c.l.b16 %v654
  %v730 = vunpack.c.h.b16 %v654
  %v731 = vunpack.c.l.b16 %v655
  %v732 = vunpack.c.h.b16 %v655
  %v733 = vunpack.c.l.b16 %v656
  %v734 = vunpack.c.h.b16 %v656
  %v735 = vunpack.c.l.b16 %v657
  %v736 = vunpack.c.h.b16 %v657
  %v737 = vunpack.c.l.b16 %v658
  %v738 = vunpack.c.h.b16 %v658
  %v739 = vunpack.c.l.b16 %v659
  %v740 = vunpack.c.h.b16 %v659
  %v741 = vunpack.c.l.b16 %v660
  %v742 = vunpack.c.h.b16 %v660
  %v743 = vunpack.c.l.b16 %v661
  %v744 = vunpack.c.h.b16 %v661
  %v745 = vunpack.c.l.b16 %v662
  %v746 = vunpack.c.h.b16 %v662
  %v747 = vunpack.c.l.b16 %v663
  %v748 = vunpack.c.h.b16 %v663
  %v749 = vunpack.c.l.b16 %v664
  %v750 = vunpack.c.h.b16 %v664
  %v751 = vunpack.c.l.b16 %v665
  %v752 = vunpack.c.h.b16 %v665
  %v753 = vunpack.c.l.b16 %v666
  %v754 = vunpack.c.h.b16 %v666
  %v755 = vunpack.c.l.b16 %v667
  %v756 = vunpack.c.h.b16 %v667
  %v757 = vunpack.c.l.b16 %v668
  %v758 = vunpack.c.h.b16 %v668
  %v759 = vunpack.c.l.b16 %v669
  %v760 = vunpack.c.h.b16 %v669
  %v761 = vunpack.c.l.b16 %v670
  %v762 = vunpack.c.h.b16 %v670
  %v763 = vunpack.c.l.b16 %v671
  %v764 = vunpack.c.h.b16 %v671
  %v765 = vunpack.c.l.b16 %v672
  %v766 = vunpack.c.h.b16 %v672
  %v767 = vunpack.c.l.b16 %v673
  %v768 = vunpack.c.h.b16 %v673
  %v769 = vunpack.c.l.b16 %v674
  %v770 = vunpack.c.h.b16 %v674
  %v771 = vpack.c.b16 %v711, %v707
  %v772 = vpack.c.b16 %v712, %v708
  %v773 = vpack.c.b16 %v713, %v709
  %v774 = vpack.c.b16 %v714, %v710
  %v775 = vpack.c.b16 %v719, %v715
  %v776 = vpack.c.b16 %v720, %v716
  %v777 = vpack.c.b16 %v721, %v717
  %v778 = vpack.c.b16 %v722, %v718
  %v779 = vpack.c.b16 %v727, %v723
  %v780 = vpack.c.b16 %v728, %v724
  %v781 = vpack.c.b16 %v729, %v725
  %v782 = vpack.c.b16 %v730, %v726
  %v783 = vpack.c.b16 %v735, %v731
  %v784 = vpack.c.b16 %v736, %v732
  %v785 = vpack.c.b16 %v737, %v733
  %v786 = vpack.c.b16 %v738, %v734
  %v787 = vpack.c.b16 %v743, %v739
  %v788 = vpack.c.b16 %v744, %v740
  %v789 = vpack.c.b16 %v745, %v741
  %v790 = vpack.c.b16 %v746, %v742
  %v791 = vpack.c.b16 %v751, %v747
  %v792 = vpack.c.b16 %v752, %v748
  %v793 = vpack.c.b16 %v753, %v749
  %v794 = vpack.c.b16 %v754, %v750
  %v795 = vpack.c.b16 %v759, %v755
  %v796 = vpack.c.b16 %v760, %v756
  %v797 = vpack.c.b16 %v761, %v757
  %v798 = vpack.c.b16 %v762, %v758
  %v799 = vpack.c.b16 %v767, %v763
  %v800 = vpack.c.b16 %v768, %v764
  %v801 = vpack.c.b16 %v769, %v765
  %v802 = vpack.c.b16 %v770, %v766
  %835 = vmatprep.subr.bf16.mxu0 %v772
  %836 = vmatpush1.bf16.msra.mxu0 %v771
  %837 = vmatprep.subr.bf16.mxu0 %v776
  %838 = vmatpush1.bf16.msra.mxu0 %v775
  %839 = vmatprep.subr.bf16.mxu0 %v780
  %840 = vmatpush1.bf16.msra.mxu0 %v779
  %841 = vmatprep.subr.bf16.mxu0 %v784
  %842 = vmatpush1.bf16.msra.mxu0 %v783
  %843 = vmatprep.subr.bf16.mxu0 %v788
  %844 = vmatpush1.bf16.msra.mxu0 %v787
  %845 = vmatprep.subr.bf16.mxu0 %v792
  %846 = vmatpush1.bf16.msra.mxu0 %v791
  %847 = vmatprep.subr.bf16.mxu0 %v796
  %848 = vmatpush1.bf16.msra.mxu0 %v795
  %849 = vmatprep.subr.bf16.mxu0 %v800
  %850 = vmatpush1.bf16.msra.mxu0 %v799
  %851 = vmatprep.subr.bf16.mxu0 0
  %852 = vmatpush1.bf16.msra.mxu0 0
  %853 = vmatprep.subr.bf16.mxu0 0
  %854 = vmatpush1.bf16.msra.mxu0 0
  %855 = vmatprep.subr.bf16.mxu0 0
  %856 = vmatpush1.bf16.msra.mxu0 0
  %857 = vmatprep.subr.bf16.mxu0 0
  %858 = vmatpush1.bf16.msra.mxu0 0
  %859 = vmatprep.subr.bf16.mxu0 0
  %860 = vmatpush1.bf16.msra.mxu0 0
  %861 = vmatprep.subr.bf16.mxu0 0
  %862 = vmatpush1.bf16.msra.mxu0 0
  %863 = vmatprep.subr.bf16.mxu0 0
  %864 = vmatpush1.bf16.msra.mxu0 0
  %865 = vmatprep.subr.bf16.mxu0 0
  %866 = vmatpush1.bf16.msra.mxu0 0
  %867 = vmatprep.mubr.bf16.mxu0 0
  %868 = vmatmul.mubr.bf16.gmra.mrb[0].mxu0 %v642
  %v869 = vpop.f32.mrb[0].mxu0
  %v870 = vadd.f32 0.0, %v869
  %v871 = vpop.f32.mrb[0].mxu0
  %v872 = vadd.f32 0.0, %v871
  %v873 = vpop.f32.mrb[0].mxu0
  %v874 = vpop.f32.mrb[0].mxu0
  %875 = vdwg.mxu0
  %876 = vmatprep.subr.bf16.mxu0 %v774
  %877 = vmatpush1.bf16.msra.mxu0 %v773
  %878 = vmatprep.subr.bf16.mxu0 %v778
  %879 = vmatpush1.bf16.msra.mxu0 %v777
  %880 = vmatprep.subr.bf16.mxu0 %v782
  %881 = vmatpush1.bf16.msra.mxu0 %v781
  %882 = vmatprep.subr.bf16.mxu0 %v786
  %883 = vmatpush1.bf16.msra.mxu0 %v785
  %884 = vmatprep.subr.bf16.mxu0 %v790
  %885 = vmatpush1.bf16.msra.mxu0 %v789
  %886 = vmatprep.subr.bf16.mxu0 %v794
  %887 = vmatpush1.bf16.msra.mxu0 %v793
  %888 = vmatprep.subr.bf16.mxu0 %v798
  %889 = vmatpush1.bf16.msra.mxu0 %v797
  %890 = vmatprep.subr.bf16.mxu0 %v802
  %891 = vmatpush1.bf16.msra.mxu0 %v801
  %892 = vmatprep.subr.bf16.mxu0 0
  %893 = vmatpush1.bf16.msra.mxu0 0
  %894 = vmatprep.subr.bf16.mxu0 0
  %895 = vmatpush1.bf16.msra.mxu0 0
  %896 = vmatprep.subr.bf16.mxu0 0
  %897 = vmatpush1.bf16.msra.mxu0 0
  %898 = vmatprep.subr.bf16.mxu0 0
  %899 = vmatpush1.bf16.msra.mxu0 0
  %900 = vmatprep.subr.bf16.mxu0 0
  %901 = vmatpush1.bf16.msra.mxu0 0
  %902 = vmatprep.subr.bf16.mxu0 0
  %903 = vmatpush1.bf16.msra.mxu0 0
  %904 = vmatprep.subr.bf16.mxu0 0
  %905 = vmatpush1.bf16.msra.mxu0 0
  %906 = vmatprep.subr.bf16.mxu0 0
  %907 = vmatpush1.bf16.msra.mxu0 0
  %908 = vmatprep.mubr.bf16.mxu0 0
  %909 = vmatmul.mubr.bf16.gmra.mrb[0].mxu0 %v642
  %v910 = vpop.f32.mrb[0].mxu0
  %v911 = vadd.f32 0.0, %v910
  %v912 = vpop.f32.mrb[0].mxu0
  %v913 = vadd.f32 0.0, %v912
  %v914 = vpop.f32.mrb[0].mxu0
  %v915 = vpop.f32.mrb[0].mxu0
  %916 = vdwg.mxu0
  %s917 = scalar_lea.vmem %s0, 32
  %v918 = vld [vmem:[%s917] sm:$0xff]
  %v919 = vld [vmem:[%s917 + $0x8] sm:$0xff]
  %v920 = vunpack.c.l.bf16 %v918
  %v921 = vunpack.c.h.bf16 %v918
  %v922 = vunpack.c.l.bf16 %v919
  %v923 = vunpack.c.h.bf16 %v919
  %v924 = vadd.f32 %v920, %v870
  %v925 = vadd.f32 %v921, %v872
  %v926 = vadd.f32 %v922, %v911
  %v927 = vadd.f32 %v923, %v913
  %v928 = vxor.u32 %v924, 2147483648
  %v929 = vxor.u32 %v925, 2147483648
  %v930 = vxor.u32 %v926, 2147483648
  %v931 = vmul.f32 %v928, 1.442695
  %v932 = vpow.pop %v931
  %v933 = vmul.f32 %v929, 1.442695
  %v934 = vpow.pop %v933
  %v935 = vmul.f32 %v930, 1.442695
  %v936 = vpow.pop %v935
  %v937 = vadd.f32 %v932, 1.0
  %v938 = vadd.f32 %v934, 1.0
  %v939 = vadd.f32 %v936, 1.0
  %v940 = vrcp.pop %v937
  %v941 = vmul.f32 1.0, %v940
  %v942 = vrcp.pop %v938
  %v943 = vmul.f32 1.0, %v942
  %v944 = vrcp.pop %v939
  %v945 = vmul.f32 1.0, %v944
  %v946 = vtanh.pop %v927
  %v947 = vmul.f32 %v943, %v637
  %v948 = vmul.f32 %v941, %v946
  %v949 = vadd.f32 %v947, %v948
  %v950 = vtanh.pop %v949
  %v951 = vmul.f32 %v945, %v950
  %s952 = scalar_lea.vmem %s2, 16
  %953 = vst [vmem:[%s952] sm:$0xff] %v951
  %v954 = vpack.c.bf16 %v951, %v951
  %v955 = vld [vmem:[%s1] sm:$0xff]
  %v956 = vld [vmem:[%s1 + $0x8] sm:$0xff]
  %v957 = vld [vmem:[%s1 + $0x10] sm:$0xff]
  %v958 = vld [vmem:[%s1 + $0x18] sm:$0xff]
  %v959 = vld [vmem:[%s1 + $0x20] sm:$0xff]
  %v960 = vld [vmem:[%s1 + $0x28] sm:$0xff]
  %v961 = vld [vmem:[%s1 + $0x30] sm:$0xff]
  %v962 = vld [vmem:[%s1 + $0x38] sm:$0xff]
  %v963 = vld [vmem:[%s1 + $0x40] sm:$0xff]
  %v964 = vld [vmem:[%s1 + $0x48] sm:$0xff]
  %v965 = vld [vmem:[%s1 + $0x50] sm:$0xff]
  %v966 = vld [vmem:[%s1 + $0x58] sm:$0xff]
  %v967 = vld [vmem:[%s1 + $0x60] sm:$0xff]
  %v968 = vld [vmem:[%s1 + $0x68] sm:$0xff]
  %v969 = vld [vmem:[%s1 + $0x70] sm:$0xff]
  %v970 = vld [vmem:[%s1 + $0x78] sm:$0xff]
  %v971 = vld [vmem:[%s1 + $0x80] sm:$0xff]
  %v972 = vld [vmem:[%s1 + $0x88] sm:$0xff]
  %v973 = vld [vmem:[%s1 + $0x90] sm:$0xff]
  %v974 = vld [vmem:[%s1 + $0x98] sm:$0xff]
  %v975 = vld [vmem:[%s1 + $0xa0] sm:$0xff]
  %v976 = vld [vmem:[%s1 + $0xa8] sm:$0xff]
  %v977 = vld [vmem:[%s1 + $0xb0] sm:$0xff]
  %v978 = vld [vmem:[%s1 + $0xb8] sm:$0xff]
  %v979 = vld [vmem:[%s1 + $0xc0] sm:$0xff]
  %v980 = vld [vmem:[%s1 + $0xc8] sm:$0xff]
  %v981 = vld [vmem:[%s1 + $0xd0] sm:$0xff]
  %v982 = vld [vmem:[%s1 + $0xd8] sm:$0xff]
  %v983 = vld [vmem:[%s1 + $0xe0] sm:$0xff]
  %v984 = vld [vmem:[%s1 + $0xe8] sm:$0xff]
  %v985 = vld [vmem:[%s1 + $0xf0] sm:$0xff]
  %v986 = vld [vmem:[%s1 + $0xf8] sm:$0xff]
  %v1019 = vunpack.c.l.b16 %v955
  %v1020 = vunpack.c.h.b16 %v955
  %v1021 = vunpack.c.l.b16 %v956
  %v1022 = vunpack.c.h.b16 %v956
  %v1023 = vunpack.c.l.b16 %v957
  %v1024 = vunpack.c.h.b16 %v957
  %v1025 = vunpack.c.l.b16 %v958
  %v1026 = vunpack.c.h.b16 %v958
  %v1027 = vunpack.c.l.b16 %v959
  %v1028 = vunpack.c.h.b16 %v959
  %v1029 = vunpack.c.l.b16 %v960
  %v1030 = vunpack.c.h.b16 %v960
  %v1031 = vunpack.c.l.b16 %v961
  %v1032 = vunpack.c.h.b16 %v961
  %v1033 = vunpack.c.l.b16 %v962
  %v1034 = vunpack.c.h.b16 %v962
  %v1035 = vunpack.c.l.b16 %v963
  %v1036 = vunpack.c.h.b16 %v963
  %v1037 = vunpack.c.l.b16 %v964
  %v1038 = vunpack.c.h.b16 %v964
  %v1039 = vunpack.c.l.b16 %v965
  %v1040 = vunpack.c.h.b16 %v965
  %v1041 = vunpack.c.l.b16 %v966
  %v1042 = vunpack.c.h.b16 %v966
  %v1043 = vunpack.c.l.b16 %v967
  %v1044 = vunpack.c.h.b16 %v967
  %v1045 = vunpack.c.l.b16 %v968
  %v1046 = vunpack.c.h.b16 %v968
  %v1047 = vunpack.c.l.b16 %v969
  %v1048 = vunpack.c.h.b16 %v969
  %v1049 = vunpack.c.l.b16 %v970
  %v1050 = vunpack.c.h.b16 %v970
  %v1051 = vunpack.c.l.b16 %v971
  %v1052 = vunpack.c.h.b16 %v971
  %v1053 = vunpack.c.l.b16 %v972
  %v1054 = vunpack.c.h.b16 %v972
  %v1055 = vunpack.c.l.b16 %v973
  %v1056 = vunpack.c.h.b16 %v973
  %v1057 = vunpack.c.l.b16 %v974
  %v1058 = vunpack.c.h.b16 %v974
  %v1059 = vunpack.c.l.b16 %v975
  %v1060 = vunpack.c.h.b16 %v975
  %v1061 = vunpack.c.l.b16 %v976
  %v1062 = vunpack.c.h.b16 %v976
  %v1063 = vunpack.c.l.b16 %v977
  %v1064 = vunpack.c.h.b16 %v977
  %v1065 = vunpack.c.l.b16 %v978
  %v1066 = vunpack.c.h.b16 %v978
  %v1067 = vunpack.c.l.b16 %v979
  %v1068 = vunpack.c.h.b16 %v979
  %v1069 = vunpack.c.l.b16 %v980
  %v1070 = vunpack.c.h.b16 %v980
  %v1071 = vunpack.c.l.b16 %v981
  %v1072 = vunpack.c.h.b16 %v981
  %v1073 = vunpack.c.l.b16 %v982
  %v1074 = vunpack.c.h.b16 %v982
  %v1075 = vunpack.c.l.b16 %v983
  %v1076 = vunpack.c.h.b16 %v983
  %v1077 = vunpack.c.l.b16 %v984
  %v1078 = vunpack.c.h.b16 %v984
  %v1079 = vunpack.c.l.b16 %v985
  %v1080 = vunpack.c.h.b16 %v985
  %v1081 = vunpack.c.l.b16 %v986
  %v1082 = vunpack.c.h.b16 %v986
  %v1083 = vpack.c.b16 %v1023, %v1019
  %v1084 = vpack.c.b16 %v1024, %v1020
  %v1085 = vpack.c.b16 %v1025, %v1021
  %v1086 = vpack.c.b16 %v1026, %v1022
  %v1087 = vpack.c.b16 %v1031, %v1027
  %v1088 = vpack.c.b16 %v1032, %v1028
  %v1089 = vpack.c.b16 %v1033, %v1029
  %v1090 = vpack.c.b16 %v1034, %v1030
  %v1091 = vpack.c.b16 %v1039, %v1035
  %v1092 = vpack.c.b16 %v1040, %v1036
  %v1093 = vpack.c.b16 %v1041, %v1037
  %v1094 = vpack.c.b16 %v1042, %v1038
  %v1095 = vpack.c.b16 %v1047, %v1043
  %v1096 = vpack.c.b16 %v1048, %v1044
  %v1097 = vpack.c.b16 %v1049, %v1045
  %v1098 = vpack.c.b16 %v1050, %v1046
  %v1099 = vpack.c.b16 %v1055, %v1051
  %v1100 = vpack.c.b16 %v1056, %v1052
  %v1101 = vpack.c.b16 %v1057, %v1053
  %v1102 = vpack.c.b16 %v1058, %v1054
  %v1103 = vpack.c.b16 %v1063, %v1059
  %v1104 = vpack.c.b16 %v1064, %v1060
  %v1105 = vpack.c.b16 %v1065, %v1061
  %v1106 = vpack.c.b16 %v1066, %v1062
  %v1107 = vpack.c.b16 %v1071, %v1067
  %v1108 = vpack.c.b16 %v1072, %v1068
  %v1109 = vpack.c.b16 %v1073, %v1069
  %v1110 = vpack.c.b16 %v1074, %v1070
  %v1111 = vpack.c.b16 %v1079, %v1075
  %v1112 = vpack.c.b16 %v1080, %v1076
  %v1113 = vpack.c.b16 %v1081, %v1077
  %v1114 = vpack.c.b16 %v1082, %v1078
  %1147 = vmatprep.subr.bf16.mxu0 %v1084
  %1148 = vmatpush1.bf16.msra.mxu0 %v1083
  %1149 = vmatprep.subr.bf16.mxu0 %v1088
  %1150 = vmatpush1.bf16.msra.mxu0 %v1087
  %1151 = vmatprep.subr.bf16.mxu0 %v1092
  %1152 = vmatpush1.bf16.msra.mxu0 %v1091
  %1153 = vmatprep.subr.bf16.mxu0 %v1096
  %1154 = vmatpush1.bf16.msra.mxu0 %v1095
  %1155 = vmatprep.subr.bf16.mxu0 %v1100
  %1156 = vmatpush1.bf16.msra.mxu0 %v1099
  %1157 = vmatprep.subr.bf16.mxu0 %v1104
  %1158 = vmatpush1.bf16.msra.mxu0 %v1103
  %1159 = vmatprep.subr.bf16.mxu0 %v1108
  %1160 = vmatpush1.bf16.msra.mxu0 %v1107
  %1161 = vmatprep.subr.bf16.mxu0 %v1112
  %1162 = vmatpush1.bf16.msra.mxu0 %v1111
  %1163 = vmatprep.subr.bf16.mxu0 0
  %1164 = vmatpush1.bf16.msra.mxu0 0
  %1165 = vmatprep.subr.bf16.mxu0 0
  %1166 = vmatpush1.bf16.msra.mxu0 0
  %1167 = vmatprep.subr.bf16.mxu0 0
  %1168 = vmatpush1.bf16.msra.mxu0 0
  %1169 = vmatprep.subr.bf16.mxu0 0
  %1170 = vmatpush1.bf16.msra.mxu0 0
  %1171 = vmatprep.subr.bf16.mxu0 0
  %1172 = vmatpush1.bf16.msra.mxu0 0
  %1173 = vmatprep.subr.bf16.mxu0 0
  %1174 = vmatpush1.bf16.msra.mxu0 0
  %1175 = vmatprep.subr.bf16.mxu0 0
  %1176 = vmatpush1.bf16.msra.mxu0 0
  %1177 = vmatprep.subr.bf16.mxu0 0
  %1178 = vmatpush1.bf16.msra.mxu0 0
  %1179 = vmatprep.mubr.bf16.mxu0 0
  %1180 = vmatmul.mubr.bf16.gmra.mrb[0].mxu0 %v954
  %v1181 = vpop.f32.mrb[0].mxu0
  %v1182 = vadd.f32 0.0, %v1181
  %v1183 = vpop.f32.mrb[0].mxu0
  %v1184 = vadd.f32 0.0, %v1183
  %v1185 = vpop.f32.mrb[0].mxu0
  %v1186 = vpop.f32.mrb[0].mxu0
  %1187 = vdwg.mxu0
  %1188 = vmatprep.subr.bf16.mxu0 %v1086
  %1189 = vmatpush1.bf16.msra.mxu0 %v1085
  %1190 = vmatprep.subr.bf16.mxu0 %v1090
  %1191 = vmatpush1.bf16.msra.mxu0 %v1089
  %1192 = vmatprep.subr.bf16.mxu0 %v1094
  %1193 = vmatpush1.bf16.msra.mxu0 %v1093
  %1194 = vmatprep.subr.bf16.mxu0 %v1098
  %1195 = vmatpush1.bf16.msra.mxu0 %v1097
  %1196 = vmatprep.subr.bf16.mxu0 %v1102
  %1197 = vmatpush1.bf16.msra.mxu0 %v1101
  %1198 = vmatprep.subr.bf16.mxu0 %v1106
  %1199 = vmatpush1.bf16.msra.mxu0 %v1105
  %1200 = vmatprep.subr.bf16.mxu0 %v1110
  %1201 = vmatpush1.bf16.msra.mxu0 %v1109
  %1202 = vmatprep.subr.bf16.mxu0 %v1114
  %1203 = vmatpush1.bf16.msra.mxu0 %v1113
  %1204 = vmatprep.subr.bf16.mxu0 0
  %1205 = vmatpush1.bf16.msra.mxu0 0
  %1206 = vmatprep.subr.bf16.mxu0 0
  %1207 = vmatpush1.bf16.msra.mxu0 0
  %1208 = vmatprep.subr.bf16.mxu0 0
  %1209 = vmatpush1.bf16.msra.mxu0 0
  %1210 = vmatprep.subr.bf16.mxu0 0
  %1211 = vmatpush1.bf16.msra.mxu0 0
  %1212 = vmatprep.subr.bf16.mxu0 0
  %1213 = vmatpush1.bf16.msra.mxu0 0
  %1214 = vmatprep.subr.bf16.mxu0 0
  %1215 = vmatpush1.bf16.msra.mxu0 0
  %1216 = vmatprep.subr.bf16.mxu0 0
  %1217 = vmatpush1.bf16.msra.mxu0 0
  %1218 = vmatprep.subr.bf16.mxu0 0
  %1219 = vmatpush1.bf16.msra.mxu0 0
  %1220 = vmatprep.mubr.bf16.mxu0 0
  %1221 = vmatmul.mubr.bf16.gmra.mrb[0].mxu0 %v954
  %v1222 = vpop.f32.mrb[0].mxu0
  %v1223 = vadd.f32 0.0, %v1222
  %v1224 = vpop.f32.mrb[0].mxu0
  %v1225 = vadd.f32 0.0, %v1224
  %v1226 = vpop.f32.mrb[0].mxu0
  %v1227 = vpop.f32.mrb[0].mxu0
  %1228 = vdwg.mxu0
  %s1229 = scalar_lea.vmem %s0, 48
  %v1230 = vld [vmem:[%s1229] sm:$0xff]
  %v1231 = vld [vmem:[%s1229 + $0x8] sm:$0xff]
  %v1232 = vunpack.c.l.bf16 %v1230
  %v1233 = vunpack.c.h.bf16 %v1230
  %v1234 = vunpack.c.l.bf16 %v1231
  %v1235 = vunpack.c.h.bf16 %v1231
  %v1236 = vadd.f32 %v1232, %v1182
  %v1237 = vadd.f32 %v1233, %v1184
  %v1238 = vadd.f32 %v1234, %v1223
  %v1239 = vadd.f32 %v1235, %v1225
  %v1240 = vxor.u32 %v1236, 2147483648
  %v1241 = vxor.u32 %v1237, 2147483648
  %v1242 = vxor.u32 %v1238, 2147483648
  %v1243 = vmul.f32 %v1240, 1.442695
  %v1244 = vpow.pop %v1243
  %v1245 = vmul.f32 %v1241, 1.442695
  %v1246 = vpow.pop %v1245
  %v1247 = vmul.f32 %v1242, 1.442695
  %v1248 = vpow.pop %v1247
  %v1249 = vadd.f32 %v1244, 1.0
  %v1250 = vadd.f32 %v1246, 1.0
  %v1251 = vadd.f32 %v1248, 1.0
  %v1252 = vrcp.pop %v1249
  %v1253 = vmul.f32 1.0, %v1252
  %v1254 = vrcp.pop %v1250
  %v1255 = vmul.f32 1.0, %v1254
  %v1256 = vrcp.pop %v1251
  %v1257 = vmul.f32 1.0, %v1256
  %v1258 = vtanh.pop %v1239
  %v1259 = vmul.f32 %v1255, %v949
  %v1260 = vmul.f32 %v1253, %v1258
  %v1261 = vadd.f32 %v1259, %v1260
  %v1262 = vtanh.pop %v1261
  %v1263 = vmul.f32 %v1257, %v1262
  %s1264 = scalar_lea.vmem %s2, 24
  %1265 = vst [vmem:[%s1264] sm:$0xff] %v1263
  %v1266 = vpack.c.bf16 %v1263, %v1263
  %v1267 = vld [vmem:[%s1] sm:$0xff]
  %v1268 = vld [vmem:[%s1 + $0x8] sm:$0xff]
  %v1269 = vld [vmem:[%s1 + $0x10] sm:$0xff]
  %v1270 = vld [vmem:[%s1 + $0x18] sm:$0xff]
  %v1271 = vld [vmem:[%s1 + $0x20] sm:$0xff]
  %v1272 = vld [vmem:[%s1 + $0x28] sm:$0xff]
  %v1273 = vld [vmem:[%s1 + $0x30] sm:$0xff]
  %v1274 = vld [vmem:[%s1 + $0x38] sm:$0xff]
  %v1275 = vld [vmem:[%s1 + $0x40] sm:$0xff]
  %v1276 = vld [vmem:[%s1 + $0x48] sm:$0xff]
  %v1277 = vld [vmem:[%s1 + $0x50] sm:$0xff]
  %v1278 = vld [vmem:[%s1 + $0x58] sm:$0xff]
  %v1279 = vld [vmem:[%s1 + $0x60] sm:$0xff]
  %v1280 = vld [vmem:[%s1 + $0x68] sm:$0xff]
  %v1281 = vld [vmem:[%s1 + $0x70] sm:$0xff]
  %v1282 = vld [vmem:[%s1 + $0x78] sm:$0xff]
  %v1283 = vld [vmem:[%s1 + $0x80] sm:$0xff]
  %v1284 = vld [vmem:[%s1 + $0x88] sm:$0xff]
  %v1285 = vld [vmem:[%s1 + $0x90] sm:$0xff]
  %v1286 = vld [vmem:[%s1 + $0x98] sm:$0xff]
  %v1287 = vld [vmem:[%s1 + $0xa0] sm:$0xff]
  %v1288 = vld [vmem:[%s1 + $0xa8] sm:$0xff]
  %v1289 = vld [vmem:[%s1 + $0xb0] sm:$0xff]
  %v1290 = vld [vmem:[%s1 + $0xb8] sm:$0xff]
  %v1291 = vld [vmem:[%s1 + $0xc0] sm:$0xff]
  %v1292 = vld [vmem:[%s1 + $0xc8] sm:$0xff]
  %v1293 = vld [vmem:[%s1 + $0xd0] sm:$0xff]
  %v1294 = vld [vmem:[%s1 + $0xd8] sm:$0xff]
  %v1295 = vld [vmem:[%s1 + $0xe0] sm:$0xff]
  %v1296 = vld [vmem:[%s1 + $0xe8] sm:$0xff]
  %v1297 = vld [vmem:[%s1 + $0xf0] sm:$0xff]
  %v1298 = vld [vmem:[%s1 + $0xf8] sm:$0xff]
  %v1331 = vunpack.c.l.b16 %v1267
  %v1332 = vunpack.c.h.b16 %v1267
  %v1333 = vunpack.c.l.b16 %v1268
  %v1334 = vunpack.c.h.b16 %v1268
  %v1335 = vunpack.c.l.b16 %v1269
  %v1336 = vunpack.c.h.b16 %v1269
  %v1337 = vunpack.c.l.b16 %v1270
  %v1338 = vunpack.c.h.b16 %v1270
  %v1339 = vunpack.c.l.b16 %v1271
  %v1340 = vunpack.c.h.b16 %v1271
  %v1341 = vunpack.c.l.b16 %v1272
  %v1342 = vunpack.c.h.b16 %v1272
  %v1343 = vunpack.c.l.b16 %v1273
  %v1344 = vunpack.c.h.b16 %v1273
  %v1345 = vunpack.c.l.b16 %v1274
  %v1346 = vunpack.c.h.b16 %v1274
  %v1347 = vunpack.c.l.b16 %v1275
  %v1348 = vunpack.c.h.b16 %v1275
  %v1349 = vunpack.c.l.b16 %v1276
  %v1350 = vunpack.c.h.b16 %v1276
  %v1351 = vunpack.c.l.b16 %v1277
  %v1352 = vunpack.c.h.b16 %v1277
  %v1353 = vunpack.c.l.b16 %v1278
  %v1354 = vunpack.c.h.b16 %v1278
  %v1355 = vunpack.c.l.b16 %v1279
  %v1356 = vunpack.c.h.b16 %v1279
  %v1357 = vunpack.c.l.b16 %v1280
  %v1358 = vunpack.c.h.b16 %v1280
  %v1359 = vunpack.c.l.b16 %v1281
  %v1360 = vunpack.c.h.b16 %v1281
  %v1361 = vunpack.c.l.b16 %v1282
  %v1362 = vunpack.c.h.b16 %v1282
  %v1363 = vunpack.c.l.b16 %v1283
  %v1364 = vunpack.c.h.b16 %v1283
  %v1365 = vunpack.c.l.b16 %v1284
  %v1366 = vunpack.c.h.b16 %v1284
  %v1367 = vunpack.c.l.b16 %v1285
  %v1368 = vunpack.c.h.b16 %v1285
  %v1369 = vunpack.c.l.b16 %v1286
  %v1370 = vunpack.c.h.b16 %v1286
  %v1371 = vunpack.c.l.b16 %v1287
  %v1372 = vunpack.c.h.b16 %v1287
  %v1373 = vunpack.c.l.b16 %v1288
  %v1374 = vunpack.c.h.b16 %v1288
  %v1375 = vunpack.c.l.b16 %v1289
  %v1376 = vunpack.c.h.b16 %v1289
  %v1377 = vunpack.c.l.b16 %v1290
  %v1378 = vunpack.c.h.b16 %v1290
  %v1379 = vunpack.c.l.b16 %v1291
  %v1380 = vunpack.c.h.b16 %v1291
  %v1381 = vunpack.c.l.b16 %v1292
  %v1382 = vunpack.c.h.b16 %v1292
  %v1383 = vunpack.c.l.b16 %v1293
  %v1384 = vunpack.c.h.b16 %v1293
  %v1385 = vunpack.c.l.b16 %v1294
  %v1386 = vunpack.c.h.b16 %v1294
  %v1387 = vunpack.c.l.b16 %v1295
  %v1388 = vunpack.c.h.b16 %v1295
  %v1389 = vunpack.c.l.b16 %v1296
  %v1390 = vunpack.c.h.b16 %v1296
  %v1391 = vunpack.c.l.b16 %v1297
  %v1392 = vunpack.c.h.b16 %v1297
  %v1393 = vunpack.c.l.b16 %v1298
  %v1394 = vunpack.c.h.b16 %v1298
  %v1395 = vpack.c.b16 %v1335, %v1331
  %v1396 = vpack.c.b16 %v1336, %v1332
  %v1397 = vpack.c.b16 %v1337, %v1333
  %v1398 = vpack.c.b16 %v1338, %v1334
  %v1399 = vpack.c.b16 %v1343, %v1339
  %v1400 = vpack.c.b16 %v1344, %v1340
  %v1401 = vpack.c.b16 %v1345, %v1341
  %v1402 = vpack.c.b16 %v1346, %v1342
  %v1403 = vpack.c.b16 %v1351, %v1347
  %v1404 = vpack.c.b16 %v1352, %v1348
  %v1405 = vpack.c.b16 %v1353, %v1349
  %v1406 = vpack.c.b16 %v1354, %v1350
  %v1407 = vpack.c.b16 %v1359, %v1355
  %v1408 = vpack.c.b16 %v1360, %v1356
  %v1409 = vpack.c.b16 %v1361, %v1357
  %v1410 = vpack.c.b16 %v1362, %v1358
  %v1411 = vpack.c.b16 %v1367, %v1363
  %v1412 = vpack.c.b16 %v1368, %v1364
  %v1413 = vpack.c.b16 %v1369, %v1365
  %v1414 = vpack.c.b16 %v1370, %v1366
  %v1415 = vpack.c.b16 %v1375, %v1371
  %v1416 = vpack.c.b16 %v1376, %v1372
  %v1417 = vpack.c.b16 %v1377, %v1373
  %v1418 = vpack.c.b16 %v1378, %v1374
  %v1419 = vpack.c.b16 %v1383, %v1379
  %v1420 = vpack.c.b16 %v1384, %v1380
  %v1421 = vpack.c.b16 %v1385, %v1381
  %v1422 = vpack.c.b16 %v1386, %v1382
  %v1423 = vpack.c.b16 %v1391, %v1387
  %v1424 = vpack.c.b16 %v1392, %v1388
  %v1425 = vpack.c.b16 %v1393, %v1389
  %v1426 = vpack.c.b16 %v1394, %v1390
  %1459 = vmatprep.subr.bf16.mxu0 %v1396
  %1460 = vmatpush1.bf16.msra.mxu0 %v1395
  %1461 = vmatprep.subr.bf16.mxu0 %v1400
  %1462 = vmatpush1.bf16.msra.mxu0 %v1399
  %1463 = vmatprep.subr.bf16.mxu0 %v1404
  %1464 = vmatpush1.bf16.msra.mxu0 %v1403
  %1465 = vmatprep.subr.bf16.mxu0 %v1408
  %1466 = vmatpush1.bf16.msra.mxu0 %v1407
  %1467 = vmatprep.subr.bf16.mxu0 %v1412
  %1468 = vmatpush1.bf16.msra.mxu0 %v1411
  %1469 = vmatprep.subr.bf16.mxu0 %v1416
  %1470 = vmatpush1.bf16.msra.mxu0 %v1415
  %1471 = vmatprep.subr.bf16.mxu0 %v1420
  %1472 = vmatpush1.bf16.msra.mxu0 %v1419
  %1473 = vmatprep.subr.bf16.mxu0 %v1424
  %1474 = vmatpush1.bf16.msra.mxu0 %v1423
  %1475 = vmatprep.subr.bf16.mxu0 0
  %1476 = vmatpush1.bf16.msra.mxu0 0
  %1477 = vmatprep.subr.bf16.mxu0 0
  %1478 = vmatpush1.bf16.msra.mxu0 0
  %1479 = vmatprep.subr.bf16.mxu0 0
  %1480 = vmatpush1.bf16.msra.mxu0 0
  %1481 = vmatprep.subr.bf16.mxu0 0
  %1482 = vmatpush1.bf16.msra.mxu0 0
  %1483 = vmatprep.subr.bf16.mxu0 0
  %1484 = vmatpush1.bf16.msra.mxu0 0
  %1485 = vmatprep.subr.bf16.mxu0 0
  %1486 = vmatpush1.bf16.msra.mxu0 0
  %1487 = vmatprep.subr.bf16.mxu0 0
  %1488 = vmatpush1.bf16.msra.mxu0 0
  %1489 = vmatprep.subr.bf16.mxu0 0
  %1490 = vmatpush1.bf16.msra.mxu0 0
  %1491 = vmatprep.mubr.bf16.mxu0 0
  %1492 = vmatmul.mubr.bf16.gmra.mrb[0].mxu0 %v1266
  %v1493 = vpop.f32.mrb[0].mxu0
  %v1494 = vadd.f32 0.0, %v1493
  %v1495 = vpop.f32.mrb[0].mxu0
  %v1496 = vadd.f32 0.0, %v1495
  %v1497 = vpop.f32.mrb[0].mxu0
  %v1498 = vpop.f32.mrb[0].mxu0
  %1499 = vdwg.mxu0
  %1500 = vmatprep.subr.bf16.mxu0 %v1398
  %1501 = vmatpush1.bf16.msra.mxu0 %v1397
  %1502 = vmatprep.subr.bf16.mxu0 %v1402
  %1503 = vmatpush1.bf16.msra.mxu0 %v1401
  %1504 = vmatprep.subr.bf16.mxu0 %v1406
  %1505 = vmatpush1.bf16.msra.mxu0 %v1405
  %1506 = vmatprep.subr.bf16.mxu0 %v1410
  %1507 = vmatpush1.bf16.msra.mxu0 %v1409
  %1508 = vmatprep.subr.bf16.mxu0 %v1414
  %1509 = vmatpush1.bf16.msra.mxu0 %v1413
  %1510 = vmatprep.subr.bf16.mxu0 %v1418
  %1511 = vmatpush1.bf16.msra.mxu0 %v1417
  %1512 = vmatprep.subr.bf16.mxu0 %v1422
  %1513 = vmatpush1.bf16.msra.mxu0 %v1421
  %1514 = vmatprep.subr.bf16.mxu0 %v1426
  %1515 = vmatpush1.bf16.msra.mxu0 %v1425
  %1516 = vmatprep.subr.bf16.mxu0 0
  %1517 = vmatpush1.bf16.msra.mxu0 0
  %1518 = vmatprep.subr.bf16.mxu0 0
  %1519 = vmatpush1.bf16.msra.mxu0 0
  %1520 = vmatprep.subr.bf16.mxu0 0
  %1521 = vmatpush1.bf16.msra.mxu0 0
  %1522 = vmatprep.subr.bf16.mxu0 0
  %1523 = vmatpush1.bf16.msra.mxu0 0
  %1524 = vmatprep.subr.bf16.mxu0 0
  %1525 = vmatpush1.bf16.msra.mxu0 0
  %1526 = vmatprep.subr.bf16.mxu0 0
  %1527 = vmatpush1.bf16.msra.mxu0 0
  %1528 = vmatprep.subr.bf16.mxu0 0
  %1529 = vmatpush1.bf16.msra.mxu0 0
  %1530 = vmatprep.subr.bf16.mxu0 0
  %1531 = vmatpush1.bf16.msra.mxu0 0
  %1532 = vmatprep.mubr.bf16.mxu0 0
  %1533 = vmatmul.mubr.bf16.gmra.mrb[0].mxu0 %v1266
  %v1534 = vpop.f32.mrb[0].mxu0
  %v1535 = vadd.f32 0.0, %v1534
  %v1536 = vpop.f32.mrb[0].mxu0
  %v1537 = vadd.f32 0.0, %v1536
  %v1538 = vpop.f32.mrb[0].mxu0
  %v1539 = vpop.f32.mrb[0].mxu0
  %1540 = vdwg.mxu0
  %s1541 = scalar_lea.vmem %s0, 64
  %v1542 = vld [vmem:[%s1541] sm:$0xff]
  %v1543 = vld [vmem:[%s1541 + $0x8] sm:$0xff]
  %v1544 = vunpack.c.l.bf16 %v1542
  %v1545 = vunpack.c.h.bf16 %v1542
  %v1546 = vunpack.c.l.bf16 %v1543
  %v1547 = vunpack.c.h.bf16 %v1543
  %v1548 = vadd.f32 %v1544, %v1494
  %v1549 = vadd.f32 %v1545, %v1496
  %v1550 = vadd.f32 %v1546, %v1535
  %v1551 = vadd.f32 %v1547, %v1537
  %v1552 = vxor.u32 %v1548, 2147483648
  %v1553 = vxor.u32 %v1549, 2147483648
  %v1554 = vxor.u32 %v1550, 2147483648
  %v1555 = vmul.f32 %v1552, 1.442695
  %v1556 = vpow.pop %v1555
  %v1557 = vmul.f32 %v1553, 1.442695
  %v1558 = vpow.pop %v1557
  %v1559 = vmul.f32 %v1554, 1.442695
  %v1560 = vpow.pop %v1559
  %v1561 = vadd.f32 %v1556, 1.0
  %v1562 = vadd.f32 %v1558, 1.0
  %v1563 = vadd.f32 %v1560, 1.0
  %v1564 = vrcp.pop %v1561
  %v1565 = vmul.f32 1.0, %v1564
  %v1566 = vrcp.pop %v1562
  %v1567 = vmul.f32 1.0, %v1566
  %v1568 = vrcp.pop %v1563
  %v1569 = vmul.f32 1.0, %v1568
  %v1570 = vtanh.pop %v1551
  %v1571 = vmul.f32 %v1567, %v1261
  %v1572 = vmul.f32 %v1565, %v1570
  %v1573 = vadd.f32 %v1571, %v1572
  %v1574 = vtanh.pop %v1573
  %v1575 = vmul.f32 %v1569, %v1574
  %s1576 = scalar_lea.vmem %s2, 32
  %1577 = vst [vmem:[%s1576] sm:$0xff] %v1575
  %v1578 = vpack.c.bf16 %v1575, %v1575
  %v1579 = vld [vmem:[%s1] sm:$0xff]
  %v1580 = vld [vmem:[%s1 + $0x8] sm:$0xff]
  %v1581 = vld [vmem:[%s1 + $0x10] sm:$0xff]
  %v1582 = vld [vmem:[%s1 + $0x18] sm:$0xff]
  %v1583 = vld [vmem:[%s1 + $0x20] sm:$0xff]
  %v1584 = vld [vmem:[%s1 + $0x28] sm:$0xff]
  %v1585 = vld [vmem:[%s1 + $0x30] sm:$0xff]
  %v1586 = vld [vmem:[%s1 + $0x38] sm:$0xff]
  %v1587 = vld [vmem:[%s1 + $0x40] sm:$0xff]
  %v1588 = vld [vmem:[%s1 + $0x48] sm:$0xff]
  %v1589 = vld [vmem:[%s1 + $0x50] sm:$0xff]
  %v1590 = vld [vmem:[%s1 + $0x58] sm:$0xff]
  %v1591 = vld [vmem:[%s1 + $0x60] sm:$0xff]
  %v1592 = vld [vmem:[%s1 + $0x68] sm:$0xff]
  %v1593 = vld [vmem:[%s1 + $0x70] sm:$0xff]
  %v1594 = vld [vmem:[%s1 + $0x78] sm:$0xff]
  %v1595 = vld [vmem:[%s1 + $0x80] sm:$0xff]
  %v1596 = vld [vmem:[%s1 + $0x88] sm:$0xff]
  %v1597 = vld [vmem:[%s1 + $0x90] sm:$0xff]
  %v1598 = vld [vmem:[%s1 + $0x98] sm:$0xff]
  %v1599 = vld [vmem:[%s1 + $0xa0] sm:$0xff]
  %v1600 = vld [vmem:[%s1 + $0xa8] sm:$0xff]
  %v1601 = vld [vmem:[%s1 + $0xb0] sm:$0xff]
  %v1602 = vld [vmem:[%s1 + $0xb8] sm:$0xff]
  %v1603 = vld [vmem:[%s1 + $0xc0] sm:$0xff]
  %v1604 = vld [vmem:[%s1 + $0xc8] sm:$0xff]
  %v1605 = vld [vmem:[%s1 + $0xd0] sm:$0xff]
  %v1606 = vld [vmem:[%s1 + $0xd8] sm:$0xff]
  %v1607 = vld [vmem:[%s1 + $0xe0] sm:$0xff]
  %v1608 = vld [vmem:[%s1 + $0xe8] sm:$0xff]
  %v1609 = vld [vmem:[%s1 + $0xf0] sm:$0xff]
  %v1610 = vld [vmem:[%s1 + $0xf8] sm:$0xff]
  %v1643 = vunpack.c.l.b16 %v1579
  %v1644 = vunpack.c.h.b16 %v1579
  %v1645 = vunpack.c.l.b16 %v1580
  %v1646 = vunpack.c.h.b16 %v1580
  %v1647 = vunpack.c.l.b16 %v1581
  %v1648 = vunpack.c.h.b16 %v1581
  %v1649 = vunpack.c.l.b16 %v1582
  %v1650 = vunpack.c.h.b16 %v1582
  %v1651 = vunpack.c.l.b16 %v1583
  %v1652 = vunpack.c.h.b16 %v1583
  %v1653 = vunpack.c.l.b16 %v1584
  %v1654 = vunpack.c.h.b16 %v1584
  %v1655 = vunpack.c.l.b16 %v1585
  %v1656 = vunpack.c.h.b16 %v1585
  %v1657 = vunpack.c.l.b16 %v1586
  %v1658 = vunpack.c.h.b16 %v1586
  %v1659 = vunpack.c.l.b16 %v1587
  %v1660 = vunpack.c.h.b16 %v1587
  %v1661 = vunpack.c.l.b16 %v1588
  %v1662 = vunpack.c.h.b16 %v1588
  %v1663 = vunpack.c.l.b16 %v1589
  %v1664 = vunpack.c.h.b16 %v1589
  %v1665 = vunpack.c.l.b16 %v1590
  %v1666 = vunpack.c.h.b16 %v1590
  %v1667 = vunpack.c.l.b16 %v1591
  %v1668 = vunpack.c.h.b16 %v1591
  %v1669 = vunpack.c.l.b16 %v1592
  %v1670 = vunpack.c.h.b16 %v1592
  %v1671 = vunpack.c.l.b16 %v1593
  %v1672 = vunpack.c.h.b16 %v1593
  %v1673 = vunpack.c.l.b16 %v1594
  %v1674 = vunpack.c.h.b16 %v1594
  %v1675 = vunpack.c.l.b16 %v1595
  %v1676 = vunpack.c.h.b16 %v1595
  %v1677 = vunpack.c.l.b16 %v1596
  %v1678 = vunpack.c.h.b16 %v1596
  %v1679 = vunpack.c.l.b16 %v1597
  %v1680 = vunpack.c.h.b16 %v1597
  %v1681 = vunpack.c.l.b16 %v1598
  %v1682 = vunpack.c.h.b16 %v1598
  %v1683 = vunpack.c.l.b16 %v1599
  %v1684 = vunpack.c.h.b16 %v1599
  %v1685 = vunpack.c.l.b16 %v1600
  %v1686 = vunpack.c.h.b16 %v1600
  %v1687 = vunpack.c.l.b16 %v1601
  %v1688 = vunpack.c.h.b16 %v1601
  %v1689 = vunpack.c.l.b16 %v1602
  %v1690 = vunpack.c.h.b16 %v1602
  %v1691 = vunpack.c.l.b16 %v1603
  %v1692 = vunpack.c.h.b16 %v1603
  %v1693 = vunpack.c.l.b16 %v1604
  %v1694 = vunpack.c.h.b16 %v1604
  %v1695 = vunpack.c.l.b16 %v1605
  %v1696 = vunpack.c.h.b16 %v1605
  %v1697 = vunpack.c.l.b16 %v1606
  %v1698 = vunpack.c.h.b16 %v1606
  %v1699 = vunpack.c.l.b16 %v1607
  %v1700 = vunpack.c.h.b16 %v1607
  %v1701 = vunpack.c.l.b16 %v1608
  %v1702 = vunpack.c.h.b16 %v1608
  %v1703 = vunpack.c.l.b16 %v1609
  %v1704 = vunpack.c.h.b16 %v1609
  %v1705 = vunpack.c.l.b16 %v1610
  %v1706 = vunpack.c.h.b16 %v1610
  %v1707 = vpack.c.b16 %v1647, %v1643
  %v1708 = vpack.c.b16 %v1648, %v1644
  %v1709 = vpack.c.b16 %v1649, %v1645
  %v1710 = vpack.c.b16 %v1650, %v1646
  %v1711 = vpack.c.b16 %v1655, %v1651
  %v1712 = vpack.c.b16 %v1656, %v1652
  %v1713 = vpack.c.b16 %v1657, %v1653
  %v1714 = vpack.c.b16 %v1658, %v1654
  %v1715 = vpack.c.b16 %v1663, %v1659
  %v1716 = vpack.c.b16 %v1664, %v1660
  %v1717 = vpack.c.b16 %v1665, %v1661
  %v1718 = vpack.c.b16 %v1666, %v1662
  %v1719 = vpack.c.b16 %v1671, %v1667
  %v1720 = vpack.c.b16 %v1672, %v1668
  %v1721 = vpack.c.b16 %v1673, %v1669
  %v1722 = vpack.c.b16 %v1674, %v1670
  %v1723 = vpack.c.b16 %v1679, %v1675
  %v1724 = vpack.c.b16 %v1680, %v1676
  %v1725 = vpack.c.b16 %v1681, %v1677
  %v1726 = vpack.c.b16 %v1682, %v1678
  %v1727 = vpack.c.b16 %v1687, %v1683
  %v1728 = vpack.c.b16 %v1688, %v1684
  %v1729 = vpack.c.b16 %v1689, %v1685
  %v1730 = vpack.c.b16 %v1690, %v1686
  %v1731 = vpack.c.b16 %v1695, %v1691
  %v1732 = vpack.c.b16 %v1696, %v1692
  %v1733 = vpack.c.b16 %v1697, %v1693
  %v1734 = vpack.c.b16 %v1698, %v1694
  %v1735 = vpack.c.b16 %v1703, %v1699
  %v1736 = vpack.c.b16 %v1704, %v1700
  %v1737 = vpack.c.b16 %v1705, %v1701
  %v1738 = vpack.c.b16 %v1706, %v1702
  %1771 = vmatprep.subr.bf16.mxu0 %v1708
  %1772 = vmatpush1.bf16.msra.mxu0 %v1707
  %1773 = vmatprep.subr.bf16.mxu0 %v1712
  %1774 = vmatpush1.bf16.msra.mxu0 %v1711
  %1775 = vmatprep.subr.bf16.mxu0 %v1716
  %1776 = vmatpush1.bf16.msra.mxu0 %v1715
  %1777 = vmatprep.subr.bf16.mxu0 %v1720
  %1778 = vmatpush1.bf16.msra.mxu0 %v1719
  %1779 = vmatprep.subr.bf16.mxu0 %v1724
  %1780 = vmatpush1.bf16.msra.mxu0 %v1723
  %1781 = vmatprep.subr.bf16.mxu0 %v1728
  %1782 = vmatpush1.bf16.msra.mxu0 %v1727
  %1783 = vmatprep.subr.bf16.mxu0 %v1732
  %1784 = vmatpush1.bf16.msra.mxu0 %v1731
  %1785 = vmatprep.subr.bf16.mxu0 %v1736
  %1786 = vmatpush1.bf16.msra.mxu0 %v1735
  %1787 = vmatprep.subr.bf16.mxu0 0
  %1788 = vmatpush1.bf16.msra.mxu0 0
  %1789 = vmatprep.subr.bf16.mxu0 0
  %1790 = vmatpush1.bf16.msra.mxu0 0
  %1791 = vmatprep.subr.bf16.mxu0 0
  %1792 = vmatpush1.bf16.msra.mxu0 0
  %1793 = vmatprep.subr.bf16.mxu0 0
  %1794 = vmatpush1.bf16.msra.mxu0 0
  %1795 = vmatprep.subr.bf16.mxu0 0
  %1796 = vmatpush1.bf16.msra.mxu0 0
  %1797 = vmatprep.subr.bf16.mxu0 0
  %1798 = vmatpush1.bf16.msra.mxu0 0
  %1799 = vmatprep.subr.bf16.mxu0 0
  %1800 = vmatpush1.bf16.msra.mxu0 0
  %1801 = vmatprep.subr.bf16.mxu0 0
  %1802 = vmatpush1.bf16.msra.mxu0 0
  %1803 = vmatprep.mubr.bf16.mxu0 0
  %1804 = vmatmul.mubr.bf16.gmra.mrb[0].mxu0 %v1578
  %v1805 = vpop.f32.mrb[0].mxu0
  %v1806 = vadd.f32 0.0, %v1805
  %v1807 = vpop.f32.mrb[0].mxu0
  %v1808 = vadd.f32 0.0, %v1807
  %v1809 = vpop.f32.mrb[0].mxu0
  %v1810 = vpop.f32.mrb[0].mxu0
  %1811 = vdwg.mxu0
  %1812 = vmatprep.subr.bf16.mxu0 %v1710
  %1813 = vmatpush1.bf16.msra.mxu0 %v1709
  %1814 = vmatprep.subr.bf16.mxu0 %v1714
  %1815 = vmatpush1.bf16.msra.mxu0 %v1713
  %1816 = vmatprep.subr.bf16.mxu0 %v1718
  %1817 = vmatpush1.bf16.msra.mxu0 %v1717
  %1818 = vmatprep.subr.bf16.mxu0 %v1722
  %1819 = vmatpush1.bf16.msra.mxu0 %v1721
  %1820 = vmatprep.subr.bf16.mxu0 %v1726
  %1821 = vmatpush1.bf16.msra.mxu0 %v1725
  %1822 = vmatprep.subr.bf16.mxu0 %v1730
  %1823 = vmatpush1.bf16.msra.mxu0 %v1729
  %1824 = vmatprep.subr.bf16.mxu0 %v1734
  %1825 = vmatpush1.bf16.msra.mxu0 %v1733
  %1826 = vmatprep.subr.bf16.mxu0 %v1738
  %1827 = vmatpush1.bf16.msra.mxu0 %v1737
  %1828 = vmatprep.subr.bf16.mxu0 0
  %1829 = vmatpush1.bf16.msra.mxu0 0
  %1830 = vmatprep.subr.bf16.mxu0 0
  %1831 = vmatpush1.bf16.msra.mxu0 0
  %1832 = vmatprep.subr.bf16.mxu0 0
  %1833 = vmatpush1.bf16.msra.mxu0 0
  %1834 = vmatprep.subr.bf16.mxu0 0
  %1835 = vmatpush1.bf16.msra.mxu0 0
  %1836 = vmatprep.subr.bf16.mxu0 0
  %1837 = vmatpush1.bf16.msra.mxu0 0
  %1838 = vmatprep.subr.bf16.mxu0 0
  %1839 = vmatpush1.bf16.msra.mxu0 0
  %1840 = vmatprep.subr.bf16.mxu0 0
  %1841 = vmatpush1.bf16.msra.mxu0 0
  %1842 = vmatprep.subr.bf16.mxu0 0
  %1843 = vmatpush1.bf16.msra.mxu0 0
  %1844 = vmatprep.mubr.bf16.mxu0 0
  %1845 = vmatmul.mubr.bf16.gmra.mrb[0].mxu0 %v1578
  %v1846 = vpop.f32.mrb[0].mxu0
  %v1847 = vadd.f32 0.0, %v1846
  %v1848 = vpop.f32.mrb[0].mxu0
  %v1849 = vadd.f32 0.0, %v1848
  %v1850 = vpop.f32.mrb[0].mxu0
  %v1851 = vpop.f32.mrb[0].mxu0
  %1852 = vdwg.mxu0
  %s1853 = scalar_lea.vmem %s0, 80
  %v1854 = vld [vmem:[%s1853] sm:$0xff]
  %v1855 = vld [vmem:[%s1853 + $0x8] sm:$0xff]
  %v1856 = vunpack.c.l.bf16 %v1854
  %v1857 = vunpack.c.h.bf16 %v1854
  %v1858 = vunpack.c.l.bf16 %v1855
  %v1859 = vunpack.c.h.bf16 %v1855
  %v1860 = vadd.f32 %v1856, %v1806
  %v1861 = vadd.f32 %v1857, %v1808
  %v1862 = vadd.f32 %v1858, %v1847
  %v1863 = vadd.f32 %v1859, %v1849
  %v1864 = vxor.u32 %v1860, 2147483648
  %v1865 = vxor.u32 %v1861, 2147483648
  %v1866 = vxor.u32 %v1862, 2147483648
  %v1867 = vmul.f32 %v1864, 1.442695
  %v1868 = vpow.pop %v1867
  %v1869 = vmul.f32 %v1865, 1.442695
  %v1870 = vpow.pop %v1869
  %v1871 = vmul.f32 %v1866, 1.442695
  %v1872 = vpow.pop %v1871
  %v1873 = vadd.f32 %v1868, 1.0
  %v1874 = vadd.f32 %v1870, 1.0
  %v1875 = vadd.f32 %v1872, 1.0
  %v1876 = vrcp.pop %v1873
  %v1877 = vmul.f32 1.0, %v1876
  %v1878 = vrcp.pop %v1874
  %v1879 = vmul.f32 1.0, %v1878
  %v1880 = vrcp.pop %v1875
  %v1881 = vmul.f32 1.0, %v1880
  %v1882 = vtanh.pop %v1863
  %v1883 = vmul.f32 %v1879, %v1573
  %v1884 = vmul.f32 %v1877, %v1882
  %v1885 = vadd.f32 %v1883, %v1884
  %v1886 = vtanh.pop %v1885
  %v1887 = vmul.f32 %v1881, %v1886
  %s1888 = scalar_lea.vmem %s2, 40
  %1889 = vst [vmem:[%s1888] sm:$0xff] %v1887
  %v1890 = vpack.c.bf16 %v1887, %v1887
  %v1891 = vld [vmem:[%s1] sm:$0xff]
  %v1892 = vld [vmem:[%s1 + $0x8] sm:$0xff]
  %v1893 = vld [vmem:[%s1 + $0x10] sm:$0xff]
  %v1894 = vld [vmem:[%s1 + $0x18] sm:$0xff]
  %v1895 = vld [vmem:[%s1 + $0x20] sm:$0xff]
  %v1896 = vld [vmem:[%s1 + $0x28] sm:$0xff]
  %v1897 = vld [vmem:[%s1 + $0x30] sm:$0xff]
  %v1898 = vld [vmem:[%s1 + $0x38] sm:$0xff]
  %v1899 = vld [vmem:[%s1 + $0x40] sm:$0xff]
  %v1900 = vld [vmem:[%s1 + $0x48] sm:$0xff]
  %v1901 = vld [vmem:[%s1 + $0x50] sm:$0xff]
  %v1902 = vld [vmem:[%s1 + $0x58] sm:$0xff]
  %v1903 = vld [vmem:[%s1 + $0x60] sm:$0xff]
  %v1904 = vld [vmem:[%s1 + $0x68] sm:$0xff]
  %v1905 = vld [vmem:[%s1 + $0x70] sm:$0xff]
  %v1906 = vld [vmem:[%s1 + $0x78] sm:$0xff]
  %v1907 = vld [vmem:[%s1 + $0x80] sm:$0xff]
  %v1908 = vld [vmem:[%s1 + $0x88] sm:$0xff]
  %v1909 = vld [vmem:[%s1 + $0x90] sm:$0xff]
  %v1910 = vld [vmem:[%s1 + $0x98] sm:$0xff]
  %v1911 = vld [vmem:[%s1 + $0xa0] sm:$0xff]
  %v1912 = vld [vmem:[%s1 + $0xa8] sm:$0xff]
  %v1913 = vld [vmem:[%s1 + $0xb0] sm:$0xff]
  %v1914 = vld [vmem:[%s1 + $0xb8] sm:$0xff]
  %v1915 = vld [vmem:[%s1 + $0xc0] sm:$0xff]
  %v1916 = vld [vmem:[%s1 + $0xc8] sm:$0xff]
  %v1917 = vld [vmem:[%s1 + $0xd0] sm:$0xff]
  %v1918 = vld [vmem:[%s1 + $0xd8] sm:$0xff]
  %v1919 = vld [vmem:[%s1 + $0xe0] sm:$0xff]
  %v1920 = vld [vmem:[%s1 + $0xe8] sm:$0xff]
  %v1921 = vld [vmem:[%s1 + $0xf0] sm:$0xff]
  %v1922 = vld [vmem:[%s1 + $0xf8] sm:$0xff]
  %v1955 = vunpack.c.l.b16 %v1891
  %v1956 = vunpack.c.h.b16 %v1891
  %v1957 = vunpack.c.l.b16 %v1892
  %v1958 = vunpack.c.h.b16 %v1892
  %v1959 = vunpack.c.l.b16 %v1893
  %v1960 = vunpack.c.h.b16 %v1893
  %v1961 = vunpack.c.l.b16 %v1894
  %v1962 = vunpack.c.h.b16 %v1894
  %v1963 = vunpack.c.l.b16 %v1895
  %v1964 = vunpack.c.h.b16 %v1895
  %v1965 = vunpack.c.l.b16 %v1896
  %v1966 = vunpack.c.h.b16 %v1896
  %v1967 = vunpack.c.l.b16 %v1897
  %v1968 = vunpack.c.h.b16 %v1897
  %v1969 = vunpack.c.l.b16 %v1898
  %v1970 = vunpack.c.h.b16 %v1898
  %v1971 = vunpack.c.l.b16 %v1899
  %v1972 = vunpack.c.h.b16 %v1899
  %v1973 = vunpack.c.l.b16 %v1900
  %v1974 = vunpack.c.h.b16 %v1900
  %v1975 = vunpack.c.l.b16 %v1901
  %v1976 = vunpack.c.h.b16 %v1901
  %v1977 = vunpack.c.l.b16 %v1902
  %v1978 = vunpack.c.h.b16 %v1902
  %v1979 = vunpack.c.l.b16 %v1903
  %v1980 = vunpack.c.h.b16 %v1903
  %v1981 = vunpack.c.l.b16 %v1904
  %v1982 = vunpack.c.h.b16 %v1904
  %v1983 = vunpack.c.l.b16 %v1905
  %v1984 = vunpack.c.h.b16 %v1905
  %v1985 = vunpack.c.l.b16 %v1906
  %v1986 = vunpack.c.h.b16 %v1906
  %v1987 = vunpack.c.l.b16 %v1907
  %v1988 = vunpack.c.h.b16 %v1907
  %v1989 = vunpack.c.l.b16 %v1908
  %v1990 = vunpack.c.h.b16 %v1908
  %v1991 = vunpack.c.l.b16 %v1909
  %v1992 = vunpack.c.h.b16 %v1909
  %v1993 = vunpack.c.l.b16 %v1910
  %v1994 = vunpack.c.h.b16 %v1910
  %v1995 = vunpack.c.l.b16 %v1911
  %v1996 = vunpack.c.h.b16 %v1911
  %v1997 = vunpack.c.l.b16 %v1912
  %v1998 = vunpack.c.h.b16 %v1912
  %v1999 = vunpack.c.l.b16 %v1913
  %v2000 = vunpack.c.h.b16 %v1913
  %v2001 = vunpack.c.l.b16 %v1914
  %v2002 = vunpack.c.h.b16 %v1914
  %v2003 = vunpack.c.l.b16 %v1915
  %v2004 = vunpack.c.h.b16 %v1915
  %v2005 = vunpack.c.l.b16 %v1916
  %v2006 = vunpack.c.h.b16 %v1916
  %v2007 = vunpack.c.l.b16 %v1917
  %v2008 = vunpack.c.h.b16 %v1917
  %v2009 = vunpack.c.l.b16 %v1918
  %v2010 = vunpack.c.h.b16 %v1918
  %v2011 = vunpack.c.l.b16 %v1919
  %v2012 = vunpack.c.h.b16 %v1919
  %v2013 = vunpack.c.l.b16 %v1920
  %v2014 = vunpack.c.h.b16 %v1920
  %v2015 = vunpack.c.l.b16 %v1921
  %v2016 = vunpack.c.h.b16 %v1921
  %v2017 = vunpack.c.l.b16 %v1922
  %v2018 = vunpack.c.h.b16 %v1922
  %v2019 = vpack.c.b16 %v1959, %v1955
  %v2020 = vpack.c.b16 %v1960, %v1956
  %v2021 = vpack.c.b16 %v1961, %v1957
  %v2022 = vpack.c.b16 %v1962, %v1958
  %v2023 = vpack.c.b16 %v1967, %v1963
  %v2024 = vpack.c.b16 %v1968, %v1964
  %v2025 = vpack.c.b16 %v1969, %v1965
  %v2026 = vpack.c.b16 %v1970, %v1966
  %v2027 = vpack.c.b16 %v1975, %v1971
  %v2028 = vpack.c.b16 %v1976, %v1972
  %v2029 = vpack.c.b16 %v1977, %v1973
  %v2030 = vpack.c.b16 %v1978, %v1974
  %v2031 = vpack.c.b16 %v1983, %v1979
  %v2032 = vpack.c.b16 %v1984, %v1980
  %v2033 = vpack.c.b16 %v1985, %v1981
  %v2034 = vpack.c.b16 %v1986, %v1982
  %v2035 = vpack.c.b16 %v1991, %v1987
  %v2036 = vpack.c.b16 %v1992, %v1988
  %v2037 = vpack.c.b16 %v1993, %v1989
  %v2038 = vpack.c.b16 %v1994, %v1990
  %v2039 = vpack.c.b16 %v1999, %v1995
  %v2040 = vpack.c.b16 %v2000, %v1996
  %v2041 = vpack.c.b16 %v2001, %v1997
  %v2042 = vpack.c.b16 %v2002, %v1998
  %v2043 = vpack.c.b16 %v2007, %v2003
  %v2044 = vpack.c.b16 %v2008, %v2004
  %v2045 = vpack.c.b16 %v2009, %v2005
  %v2046 = vpack.c.b16 %v2010, %v2006
  %v2047 = vpack.c.b16 %v2015, %v2011
  %v2048 = vpack.c.b16 %v2016, %v2012
  %v2049 = vpack.c.b16 %v2017, %v2013
  %v2050 = vpack.c.b16 %v2018, %v2014
  %2083 = vmatprep.subr.bf16.mxu0 %v2020
  %2084 = vmatpush1.bf16.msra.mxu0 %v2019
  %2085 = vmatprep.subr.bf16.mxu0 %v2024
  %2086 = vmatpush1.bf16.msra.mxu0 %v2023
  %2087 = vmatprep.subr.bf16.mxu0 %v2028
  %2088 = vmatpush1.bf16.msra.mxu0 %v2027
  %2089 = vmatprep.subr.bf16.mxu0 %v2032
  %2090 = vmatpush1.bf16.msra.mxu0 %v2031
  %2091 = vmatprep.subr.bf16.mxu0 %v2036
  %2092 = vmatpush1.bf16.msra.mxu0 %v2035
  %2093 = vmatprep.subr.bf16.mxu0 %v2040
  %2094 = vmatpush1.bf16.msra.mxu0 %v2039
  %2095 = vmatprep.subr.bf16.mxu0 %v2044
  %2096 = vmatpush1.bf16.msra.mxu0 %v2043
  %2097 = vmatprep.subr.bf16.mxu0 %v2048
  %2098 = vmatpush1.bf16.msra.mxu0 %v2047
  %2099 = vmatprep.subr.bf16.mxu0 0
  %2100 = vmatpush1.bf16.msra.mxu0 0
  %2101 = vmatprep.subr.bf16.mxu0 0
  %2102 = vmatpush1.bf16.msra.mxu0 0
  %2103 = vmatprep.subr.bf16.mxu0 0
  %2104 = vmatpush1.bf16.msra.mxu0 0
  %2105 = vmatprep.subr.bf16.mxu0 0
  %2106 = vmatpush1.bf16.msra.mxu0 0
  %2107 = vmatprep.subr.bf16.mxu0 0
  %2108 = vmatpush1.bf16.msra.mxu0 0
  %2109 = vmatprep.subr.bf16.mxu0 0
  %2110 = vmatpush1.bf16.msra.mxu0 0
  %2111 = vmatprep.subr.bf16.mxu0 0
  %2112 = vmatpush1.bf16.msra.mxu0 0
  %2113 = vmatprep.subr.bf16.mxu0 0
  %2114 = vmatpush1.bf16.msra.mxu0 0
  %2115 = vmatprep.mubr.bf16.mxu0 0
  %2116 = vmatmul.mubr.bf16.gmra.mrb[0].mxu0 %v1890
  %v2117 = vpop.f32.mrb[0].mxu0
  %v2118 = vadd.f32 0.0, %v2117
  %v2119 = vpop.f32.mrb[0].mxu0
  %v2120 = vadd.f32 0.0, %v2119
  %v2121 = vpop.f32.mrb[0].mxu0
  %v2122 = vpop.f32.mrb[0].mxu0
  %2123 = vdwg.mxu0
  %2124 = vmatprep.subr.bf16.mxu0 %v2022
  %2125 = vmatpush1.bf16.msra.mxu0 %v2021
  %2126 = vmatprep.subr.bf16.mxu0 %v2026
  %2127 = vmatpush1.bf16.msra.mxu0 %v2025
  %2128 = vmatprep.subr.bf16.mxu0 %v2030
  %2129 = vmatpush1.bf16.msra.mxu0 %v2029
  %2130 = vmatprep.subr.bf16.mxu0 %v2034
  %2131 = vmatpush1.bf16.msra.mxu0 %v2033
  %2132 = vmatprep.subr.bf16.mxu0 %v2038
  %2133 = vmatpush1.bf16.msra.mxu0 %v2037
  %2134 = vmatprep.subr.bf16.mxu0 %v2042
  %2135 = vmatpush1.bf16.msra.mxu0 %v2041
  %2136 = vmatprep.subr.bf16.mxu0 %v2046
  %2137 = vmatpush1.bf16.msra.mxu0 %v2045
  %2138 = vmatprep.subr.bf16.mxu0 %v2050
  %2139 = vmatpush1.bf16.msra.mxu0 %v2049
  %2140 = vmatprep.subr.bf16.mxu0 0
  %2141 = vmatpush1.bf16.msra.mxu0 0
  %2142 = vmatprep.subr.bf16.mxu0 0
  %2143 = vmatpush1.bf16.msra.mxu0 0
  %2144 = vmatprep.subr.bf16.mxu0 0
  %2145 = vmatpush1.bf16.msra.mxu0 0
  %2146 = vmatprep.subr.bf16.mxu0 0
  %2147 = vmatpush1.bf16.msra.mxu0 0
  %2148 = vmatprep.subr.bf16.mxu0 0
  %2149 = vmatpush1.bf16.msra.mxu0 0
  %2150 = vmatprep.subr.bf16.mxu0 0
  %2151 = vmatpush1.bf16.msra.mxu0 0
  %2152 = vmatprep.subr.bf16.mxu0 0
  %2153 = vmatpush1.bf16.msra.mxu0 0
  %2154 = vmatprep.subr.bf16.mxu0 0
  %2155 = vmatpush1.bf16.msra.mxu0 0
  %2156 = vmatprep.mubr.bf16.mxu0 0
  %2157 = vmatmul.mubr.bf16.gmra.mrb[0].mxu0 %v1890
  %v2158 = vpop.f32.mrb[0].mxu0
  %v2159 = vadd.f32 0.0, %v2158
  %v2160 = vpop.f32.mrb[0].mxu0
  %v2161 = vadd.f32 0.0, %v2160
  %v2162 = vpop.f32.mrb[0].mxu0
  %v2163 = vpop.f32.mrb[0].mxu0
  %2164 = vdwg.mxu0
  %s2165 = scalar_lea.vmem %s0, 96
  %v2166 = vld [vmem:[%s2165] sm:$0xff]
  %v2167 = vld [vmem:[%s2165 + $0x8] sm:$0xff]
  %v2168 = vunpack.c.l.bf16 %v2166
  %v2169 = vunpack.c.h.bf16 %v2166
  %v2170 = vunpack.c.l.bf16 %v2167
  %v2171 = vunpack.c.h.bf16 %v2167
  %v2172 = vadd.f32 %v2168, %v2118
  %v2173 = vadd.f32 %v2169, %v2120
  %v2174 = vadd.f32 %v2170, %v2159
  %v2175 = vadd.f32 %v2171, %v2161
  %v2176 = vxor.u32 %v2172, 2147483648
  %v2177 = vxor.u32 %v2173, 2147483648
  %v2178 = vxor.u32 %v2174, 2147483648
  %v2179 = vmul.f32 %v2176, 1.442695
  %v2180 = vpow.pop %v2179
  %v2181 = vmul.f32 %v2177, 1.442695
  %v2182 = vpow.pop %v2181
  %v2183 = vmul.f32 %v2178, 1.442695
  %v2184 = vpow.pop %v2183
  %v2185 = vadd.f32 %v2180, 1.0
  %v2186 = vadd.f32 %v2182, 1.0
  %v2187 = vadd.f32 %v2184, 1.0
  %v2188 = vrcp.pop %v2185
  %v2189 = vmul.f32 1.0, %v2188
  %v2190 = vrcp.pop %v2186
  %v2191 = vmul.f32 1.0, %v2190
  %v2192 = vrcp.pop %v2187
  %v2193 = vmul.f32 1.0, %v2192
  %v2194 = vtanh.pop %v2175
  %v2195 = vmul.f32 %v2191, %v1885
  %v2196 = vmul.f32 %v2189, %v2194
  %v2197 = vadd.f32 %v2195, %v2196
  %v2198 = vtanh.pop %v2197
  %v2199 = vmul.f32 %v2193, %v2198
  %s2200 = scalar_lea.vmem %s2, 48
  %2201 = vst [vmem:[%s2200] sm:$0xff] %v2199
  %v2202 = vpack.c.bf16 %v2199, %v2199
  %v2203 = vld [vmem:[%s1] sm:$0xff]
  %v2204 = vld [vmem:[%s1 + $0x8] sm:$0xff]
  %v2205 = vld [vmem:[%s1 + $0x10] sm:$0xff]
  %v2206 = vld [vmem:[%s1 + $0x18] sm:$0xff]
  %v2207 = vld [vmem:[%s1 + $0x20] sm:$0xff]
  %v2208 = vld [vmem:[%s1 + $0x28] sm:$0xff]
  %v2209 = vld [vmem:[%s1 + $0x30] sm:$0xff]
  %v2210 = vld [vmem:[%s1 + $0x38] sm:$0xff]
  %v2211 = vld [vmem:[%s1 + $0x40] sm:$0xff]
  %v2212 = vld [vmem:[%s1 + $0x48] sm:$0xff]
  %v2213 = vld [vmem:[%s1 + $0x50] sm:$0xff]
  %v2214 = vld [vmem:[%s1 + $0x58] sm:$0xff]
  %v2215 = vld [vmem:[%s1 + $0x60] sm:$0xff]
  %v2216 = vld [vmem:[%s1 + $0x68] sm:$0xff]
  %v2217 = vld [vmem:[%s1 + $0x70] sm:$0xff]
  %v2218 = vld [vmem:[%s1 + $0x78] sm:$0xff]
  %v2219 = vld [vmem:[%s1 + $0x80] sm:$0xff]
  %v2220 = vld [vmem:[%s1 + $0x88] sm:$0xff]
  %v2221 = vld [vmem:[%s1 + $0x90] sm:$0xff]
  %v2222 = vld [vmem:[%s1 + $0x98] sm:$0xff]
  %v2223 = vld [vmem:[%s1 + $0xa0] sm:$0xff]
  %v2224 = vld [vmem:[%s1 + $0xa8] sm:$0xff]
  %v2225 = vld [vmem:[%s1 + $0xb0] sm:$0xff]
  %v2226 = vld [vmem:[%s1 + $0xb8] sm:$0xff]
  %v2227 = vld [vmem:[%s1 + $0xc0] sm:$0xff]
  %v2228 = vld [vmem:[%s1 + $0xc8] sm:$0xff]
  %v2229 = vld [vmem:[%s1 + $0xd0] sm:$0xff]
  %v2230 = vld [vmem:[%s1 + $0xd8] sm:$0xff]
  %v2231 = vld [vmem:[%s1 + $0xe0] sm:$0xff]
  %v2232 = vld [vmem:[%s1 + $0xe8] sm:$0xff]
  %v2233 = vld [vmem:[%s1 + $0xf0] sm:$0xff]
  %v2234 = vld [vmem:[%s1 + $0xf8] sm:$0xff]
  %v2267 = vunpack.c.l.b16 %v2203
  %v2268 = vunpack.c.h.b16 %v2203
  %v2269 = vunpack.c.l.b16 %v2204
  %v2270 = vunpack.c.h.b16 %v2204
  %v2271 = vunpack.c.l.b16 %v2205
  %v2272 = vunpack.c.h.b16 %v2205
  %v2273 = vunpack.c.l.b16 %v2206
  %v2274 = vunpack.c.h.b16 %v2206
  %v2275 = vunpack.c.l.b16 %v2207
  %v2276 = vunpack.c.h.b16 %v2207
  %v2277 = vunpack.c.l.b16 %v2208
  %v2278 = vunpack.c.h.b16 %v2208
  %v2279 = vunpack.c.l.b16 %v2209
  %v2280 = vunpack.c.h.b16 %v2209
  %v2281 = vunpack.c.l.b16 %v2210
  %v2282 = vunpack.c.h.b16 %v2210
  %v2283 = vunpack.c.l.b16 %v2211
  %v2284 = vunpack.c.h.b16 %v2211
  %v2285 = vunpack.c.l.b16 %v2212
  %v2286 = vunpack.c.h.b16 %v2212
  %v2287 = vunpack.c.l.b16 %v2213
  %v2288 = vunpack.c.h.b16 %v2213
  %v2289 = vunpack.c.l.b16 %v2214
  %v2290 = vunpack.c.h.b16 %v2214
  %v2291 = vunpack.c.l.b16 %v2215
  %v2292 = vunpack.c.h.b16 %v2215
  %v2293 = vunpack.c.l.b16 %v2216
  %v2294 = vunpack.c.h.b16 %v2216
  %v2295 = vunpack.c.l.b16 %v2217
  %v2296 = vunpack.c.h.b16 %v2217
  %v2297 = vunpack.c.l.b16 %v2218
  %v2298 = vunpack.c.h.b16 %v2218
  %v2299 = vunpack.c.l.b16 %v2219
  %v2300 = vunpack.c.h.b16 %v2219
  %v2301 = vunpack.c.l.b16 %v2220
  %v2302 = vunpack.c.h.b16 %v2220
  %v2303 = vunpack.c.l.b16 %v2221
  %v2304 = vunpack.c.h.b16 %v2221
  %v2305 = vunpack.c.l.b16 %v2222
  %v2306 = vunpack.c.h.b16 %v2222
  %v2307 = vunpack.c.l.b16 %v2223
  %v2308 = vunpack.c.h.b16 %v2223
  %v2309 = vunpack.c.l.b16 %v2224
  %v2310 = vunpack.c.h.b16 %v2224
  %v2311 = vunpack.c.l.b16 %v2225
  %v2312 = vunpack.c.h.b16 %v2225
  %v2313 = vunpack.c.l.b16 %v2226
  %v2314 = vunpack.c.h.b16 %v2226
  %v2315 = vunpack.c.l.b16 %v2227
  %v2316 = vunpack.c.h.b16 %v2227
  %v2317 = vunpack.c.l.b16 %v2228
  %v2318 = vunpack.c.h.b16 %v2228
  %v2319 = vunpack.c.l.b16 %v2229
  %v2320 = vunpack.c.h.b16 %v2229
  %v2321 = vunpack.c.l.b16 %v2230
  %v2322 = vunpack.c.h.b16 %v2230
  %v2323 = vunpack.c.l.b16 %v2231
  %v2324 = vunpack.c.h.b16 %v2231
  %v2325 = vunpack.c.l.b16 %v2232
  %v2326 = vunpack.c.h.b16 %v2232
  %v2327 = vunpack.c.l.b16 %v2233
  %v2328 = vunpack.c.h.b16 %v2233
  %v2329 = vunpack.c.l.b16 %v2234
  %v2330 = vunpack.c.h.b16 %v2234
  %v2331 = vpack.c.b16 %v2271, %v2267
  %v2332 = vpack.c.b16 %v2272, %v2268
  %v2333 = vpack.c.b16 %v2273, %v2269
  %v2334 = vpack.c.b16 %v2274, %v2270
  %v2335 = vpack.c.b16 %v2279, %v2275
  %v2336 = vpack.c.b16 %v2280, %v2276
  %v2337 = vpack.c.b16 %v2281, %v2277
  %v2338 = vpack.c.b16 %v2282, %v2278
  %v2339 = vpack.c.b16 %v2287, %v2283
  %v2340 = vpack.c.b16 %v2288, %v2284
  %v2341 = vpack.c.b16 %v2289, %v2285
  %v2342 = vpack.c.b16 %v2290, %v2286
  %v2343 = vpack.c.b16 %v2295, %v2291
  %v2344 = vpack.c.b16 %v2296, %v2292
  %v2345 = vpack.c.b16 %v2297, %v2293
  %v2346 = vpack.c.b16 %v2298, %v2294
  %v2347 = vpack.c.b16 %v2303, %v2299
  %v2348 = vpack.c.b16 %v2304, %v2300
  %v2349 = vpack.c.b16 %v2305, %v2301
  %v2350 = vpack.c.b16 %v2306, %v2302
  %v2351 = vpack.c.b16 %v2311, %v2307
  %v2352 = vpack.c.b16 %v2312, %v2308
  %v2353 = vpack.c.b16 %v2313, %v2309
  %v2354 = vpack.c.b16 %v2314, %v2310
  %v2355 = vpack.c.b16 %v2319, %v2315
  %v2356 = vpack.c.b16 %v2320, %v2316
  %v2357 = vpack.c.b16 %v2321, %v2317
  %v2358 = vpack.c.b16 %v2322, %v2318
  %v2359 = vpack.c.b16 %v2327, %v2323
  %v2360 = vpack.c.b16 %v2328, %v2324
  %v2361 = vpack.c.b16 %v2329, %v2325
  %v2362 = vpack.c.b16 %v2330, %v2326
  %2395 = vmatprep.subr.bf16.mxu0 %v2332
  %2396 = vmatpush1.bf16.msra.mxu0 %v2331
  %2397 = vmatprep.subr.bf16.mxu0 %v2336
  %2398 = vmatpush1.bf16.msra.mxu0 %v2335
  %2399 = vmatprep.subr.bf16.mxu0 %v2340
  %2400 = vmatpush1.bf16.msra.mxu0 %v2339
  %2401 = vmatprep.subr.bf16.mxu0 %v2344
  %2402 = vmatpush1.bf16.msra.mxu0 %v2343
  %2403 = vmatprep.subr.bf16.mxu0 %v2348
  %2404 = vmatpush1.bf16.msra.mxu0 %v2347
  %2405 = vmatprep.subr.bf16.mxu0 %v2352
  %2406 = vmatpush1.bf16.msra.mxu0 %v2351
  %2407 = vmatprep.subr.bf16.mxu0 %v2356
  %2408 = vmatpush1.bf16.msra.mxu0 %v2355
  %2409 = vmatprep.subr.bf16.mxu0 %v2360
  %2410 = vmatpush1.bf16.msra.mxu0 %v2359
  %2411 = vmatprep.subr.bf16.mxu0 0
  %2412 = vmatpush1.bf16.msra.mxu0 0
  %2413 = vmatprep.subr.bf16.mxu0 0
  %2414 = vmatpush1.bf16.msra.mxu0 0
  %2415 = vmatprep.subr.bf16.mxu0 0
  %2416 = vmatpush1.bf16.msra.mxu0 0
  %2417 = vmatprep.subr.bf16.mxu0 0
  %2418 = vmatpush1.bf16.msra.mxu0 0
  %2419 = vmatprep.subr.bf16.mxu0 0
  %2420 = vmatpush1.bf16.msra.mxu0 0
  %2421 = vmatprep.subr.bf16.mxu0 0
  %2422 = vmatpush1.bf16.msra.mxu0 0
  %2423 = vmatprep.subr.bf16.mxu0 0
  %2424 = vmatpush1.bf16.msra.mxu0 0
  %2425 = vmatprep.subr.bf16.mxu0 0
  %2426 = vmatpush1.bf16.msra.mxu0 0
  %2427 = vmatprep.mubr.bf16.mxu0 0
  %2428 = vmatmul.mubr.bf16.gmra.mrb[0].mxu0 %v2202
  %v2429 = vpop.f32.mrb[0].mxu0
  %v2430 = vadd.f32 0.0, %v2429
  %v2431 = vpop.f32.mrb[0].mxu0
  %v2432 = vadd.f32 0.0, %v2431
  %v2433 = vpop.f32.mrb[0].mxu0
  %v2434 = vpop.f32.mrb[0].mxu0
  %2435 = vdwg.mxu0
  %2436 = vmatprep.subr.bf16.mxu0 %v2334
  %2437 = vmatpush1.bf16.msra.mxu0 %v2333
  %2438 = vmatprep.subr.bf16.mxu0 %v2338
  %2439 = vmatpush1.bf16.msra.mxu0 %v2337
  %2440 = vmatprep.subr.bf16.mxu0 %v2342
  %2441 = vmatpush1.bf16.msra.mxu0 %v2341
  %2442 = vmatprep.subr.bf16.mxu0 %v2346
  %2443 = vmatpush1.bf16.msra.mxu0 %v2345
  %2444 = vmatprep.subr.bf16.mxu0 %v2350
  %2445 = vmatpush1.bf16.msra.mxu0 %v2349
  %2446 = vmatprep.subr.bf16.mxu0 %v2354
  %2447 = vmatpush1.bf16.msra.mxu0 %v2353
  %2448 = vmatprep.subr.bf16.mxu0 %v2358
  %2449 = vmatpush1.bf16.msra.mxu0 %v2357
  %2450 = vmatprep.subr.bf16.mxu0 %v2362
  %2451 = vmatpush1.bf16.msra.mxu0 %v2361
  %2452 = vmatprep.subr.bf16.mxu0 0
  %2453 = vmatpush1.bf16.msra.mxu0 0
  %2454 = vmatprep.subr.bf16.mxu0 0
  %2455 = vmatpush1.bf16.msra.mxu0 0
  %2456 = vmatprep.subr.bf16.mxu0 0
  %2457 = vmatpush1.bf16.msra.mxu0 0
  %2458 = vmatprep.subr.bf16.mxu0 0
  %2459 = vmatpush1.bf16.msra.mxu0 0
  %2460 = vmatprep.subr.bf16.mxu0 0
  %2461 = vmatpush1.bf16.msra.mxu0 0
  %2462 = vmatprep.subr.bf16.mxu0 0
  %2463 = vmatpush1.bf16.msra.mxu0 0
  %2464 = vmatprep.subr.bf16.mxu0 0
  %2465 = vmatpush1.bf16.msra.mxu0 0
  %2466 = vmatprep.subr.bf16.mxu0 0
  %2467 = vmatpush1.bf16.msra.mxu0 0
  %2468 = vmatprep.mubr.bf16.mxu0 0
  %2469 = vmatmul.mubr.bf16.gmra.mrb[0].mxu0 %v2202
  %v2470 = vpop.f32.mrb[0].mxu0
  %v2471 = vadd.f32 0.0, %v2470
  %v2472 = vpop.f32.mrb[0].mxu0
  %v2473 = vadd.f32 0.0, %v2472
  %v2474 = vpop.f32.mrb[0].mxu0
  %v2475 = vpop.f32.mrb[0].mxu0
  %2476 = vdwg.mxu0
  %s2477 = scalar_lea.vmem %s0, 112
  %v2478 = vld [vmem:[%s2477] sm:$0xff]
  %v2479 = vld [vmem:[%s2477 + $0x8] sm:$0xff]
  %v2480 = vunpack.c.l.bf16 %v2478
  %v2481 = vunpack.c.h.bf16 %v2478
  %v2482 = vunpack.c.l.bf16 %v2479
  %v2483 = vunpack.c.h.bf16 %v2479
  %v2484 = vadd.f32 %v2480, %v2430
  %v2485 = vadd.f32 %v2481, %v2432
  %v2486 = vadd.f32 %v2482, %v2471
  %v2487 = vadd.f32 %v2483, %v2473
  %v2488 = vxor.u32 %v2484, 2147483648
  %v2489 = vxor.u32 %v2485, 2147483648
  %v2490 = vxor.u32 %v2486, 2147483648
  %v2491 = vmul.f32 %v2488, 1.442695
  %v2492 = vpow.pop %v2491
  %v2493 = vmul.f32 %v2489, 1.442695
  %v2494 = vpow.pop %v2493
  %v2495 = vmul.f32 %v2490, 1.442695
  %v2496 = vpow.pop %v2495
  %v2497 = vadd.f32 %v2492, 1.0
  %v2498 = vadd.f32 %v2494, 1.0
  %v2499 = vadd.f32 %v2496, 1.0
  %v2500 = vrcp.pop %v2497
  %v2501 = vmul.f32 1.0, %v2500
  %v2502 = vrcp.pop %v2498
  %v2503 = vmul.f32 1.0, %v2502
  %v2504 = vrcp.pop %v2499
  %v2505 = vmul.f32 1.0, %v2504
  %v2506 = vtanh.pop %v2487
  %v2507 = vmul.f32 %v2503, %v2197
  %v2508 = vmul.f32 %v2501, %v2506
  %v2509 = vadd.f32 %v2507, %v2508
  %v2510 = vtanh.pop %v2509
  %v2511 = vmul.f32 %v2505, %v2510
  %s2512 = scalar_lea.vmem %s2, 56
  %2513 = vst [vmem:[%s2512] sm:$0xff] %v2511
  %2514 = vst [vmem:[#allocation2] sm:$0xff] %v2511
  %2515 = vst [vmem:[#allocation3] sm:$0xff] %v2509
  // Predicated region
  $region14: #{p_ann_lstm_forward.1} parent=0 // pred_check
    _
  $region15: #{p_ann_lstm_forward.1} parent=0 // pred_check_branch
    %2517 = sbr.rel (0) target = $region17
  $region16: #{p_ann_lstm_forward.1} parent=0 // pred_region
    _
  $region17: #{p_ann_lstm_forward.1} parent=0 // pred_fallthru
    _
  // Predicated region
  $region18: #{p_ann_lstm_forward.1} parent=0 // pred_check
    _
  $region19: #{p_ann_lstm_forward.1} parent=0 // pred_check_branch
    %2519 = sbr.rel (0) target = $region21
  $region20: #{p_ann_lstm_forward.1} parent=0 // pred_region
    _
  $region21: #{p_ann_lstm_forward.1} parent=0 // pred_fallthru
    _

</llo_original>
